<compile_context>
chip_gen: v6e
topology: v6e:2x2x1
jax: 0.10.0
libtpu: 0.0.40
codegen_flags: <defaults>
</compile_context>

<pallas_src>
import functools
import math

import jax
import jax.numpy as jnp
from jax.experimental import pallas as pl
from jax.experimental.pallas import tpu as pltpu


def _silu(v):
    return v / (1.0 + jnp.exp(-v))


def sconv_kernel(x_ref, h0_ref, trilf_ref, trilb_ref, ind_hd_ref, ind_dh_ref,
                 wxp_ref, bxp_ref,
                 wy_ref, by_ref,
                 wdt_ref, bdt_ref, neg_a_ref, gamma_ref, beta_ref,
                 y_ref, hnext_ref,
                 state_ref,
                 *, inner_dim, eps):
    c = pl.program_id(1)
    nc = pl.num_programs(1)

    f32 = jnp.float32
    bf16 = jnp.bfloat16

    x = x_ref[0]                   # (C, D) bf16
    C, D = x.shape

    # Carried cross-chunk hidden state (1, D): init from the module input.
    @pl.when(c == 0)
    def _init_state():
        state_ref[...] = h0_ref[0]

    # --- fused x-side projections: [fc_z | fc_z_act | fc_y_act] -------------
    proj = jnp.dot(x, wxp_ref[...], preferred_element_type=f32) + bxp_ref[...]  # (C, 3D)
    zp = proj[:, 0:D]
    za = proj[:, D:2 * D]
    ya = proj[:, 2 * D:3 * D]
    z = zp * _silu(za)             # (C, D) f32  (gated value)

    # --- per-head log decay: ln_da = -exp(ln_a) * softplus(fc_dt(x)) --------
    dt = jnp.dot(x, wdt_ref[...], preferred_element_type=f32) + bdt_ref[...]   # (C, H)
    ln_da = neg_a_ref[...] * jnp.logaddexp(dt, 0.0)                            # (C, H)

    # Chunk-local inclusive cumsum via tril-ones matmul (f32, tiny).
    cs = jnp.dot(trilf_ref[...], ln_da, preferred_element_type=f32)   # (C, H), cs <= 0

    # --- factorized decay (re-based at chunk midpoint, clamped exponents) ---
    mid = C // 2
    r = cs[mid:mid + 1, :]                                  # (1, H)
    row_e = jnp.exp(jnp.clip(cs - r, -80.0, 80.0))          # (C, H)
    col_e = jnp.exp(jnp.clip(r - cs, -80.0, 80.0))          # (C, H)
    exp_cs = jnp.exp(cs)                                    # (C, H), exact (<=1)

    ind_hd = ind_hd_ref[...]                                # (H, D) 0/1 expand
    row_full = jnp.dot(row_e, ind_hd, preferred_element_type=f32)       # (C, D)
    col_full = jnp.dot(col_e, ind_hd, preferred_element_type=f32)       # (C, D)
    exp_cs_full = jnp.dot(exp_cs, ind_hd, preferred_element_type=f32)   # (C, D)

    z_scaled = (z * col_full).astype(bf16)
    t = jnp.dot(trilb_ref[...], z_scaled, preferred_element_type=f32)   # (C, D)

    state = state_ref[...]                                  # (1, D)
    h = row_full * t + exp_cs_full * state                  # h_inner + h_cross

    new_state = h[C - 1:C, :]                               # (1, D)
    state_ref[...] = new_state

    @pl.when(c == nc - 1)
    def _write_hidden_next():
        hnext_ref[0] = new_state

    # --- GroupNorm(num_head, num_head): normalize each head over inner_dim --
    ind_dh = ind_dh_ref[...]                                # (D, H) 0/1 reduce
    inv_i = 1.0 / float(inner_dim)
    mean = jnp.dot(h, ind_dh, preferred_element_type=f32) * inv_i        # (C, H)
    mean_full = jnp.dot(mean, ind_hd, preferred_element_type=f32)        # (C, D)
    d = h - mean_full
    var = jnp.dot(d * d, ind_dh, preferred_element_type=f32) * inv_i     # (C, H)
    rstd = jax.lax.rsqrt(var + eps)
    rstd_full = jnp.dot(rstd, ind_hd, preferred_element_type=f32)        # (C, D)
    h_norm = d * rstd_full * gamma_ref[...] + beta_ref[...]              # (C, D)

    # --- gated output: y = fc_y(h_norm) * silu(fc_y_act(x)) -----------------
    yl = jnp.dot(h_norm.astype(bf16), wy_ref[...],
                 preferred_element_type=f32) + by_ref[...]
    y_ref[0] = yl * _silu(ya)


def _pick_chunk(L):
    for c in (256, 128, 64, 32, 16, 8):
        if L % c == 0:
            return c
    return L


def sconv_forward(x, hidden, params, chunk=None):
    B, L, D = x.shape
    H = hidden.shape[1]
    I = D // H
    C = chunk if chunk is not None else _pick_chunk(L)
    assert L % C == 0, "seq length must be divisible by the chunk size"
    NC = L // C

    kernel = functools.partial(sconv_kernel, inner_dim=I, eps=1e-5)

    # Constants hoisted out of the per-grid-step body.
    tril_f32 = jnp.tril(jnp.ones((C, C), jnp.float32))
    tril_bf = tril_f32.astype(jnp.bfloat16)
    head_of = jnp.arange(D, dtype=jnp.int32) // I
    ind_hd = (jnp.arange(H, dtype=jnp.int32)[:, None]
              == head_of[None, :]).astype(jnp.float32)        # (H, D)
    ind_dh = jnp.transpose(ind_hd)                            # (D, H)

    x_bf = x.astype(jnp.bfloat16)
    h0 = hidden.reshape(B, 1, D).astype(jnp.float32)          # lane-dense state

    def const2(a):
        return pl.BlockSpec(a.shape, lambda b, c: (0, 0))

    in_specs = [
        pl.BlockSpec((1, C, D), lambda b, c: (b, c, 0)),      # x chunk
        pl.BlockSpec((1, 1, D), lambda b, c: (b, 0, 0)),      # hidden (B,1,D)
        const2(tril_f32), const2(tril_bf), const2(ind_hd), const2(ind_dh),
        const2(params['wxp_bf']), const2(params['bxp']),
        const2(params['wy_bf']), const2(params['by']),
        const2(params['wdt_bf']), const2(params['bdt']),
        const2(params['neg_a']), const2(params['gamma_d']), const2(params['beta_d']),
    ]
    out_specs = (
        pl.BlockSpec((1, C, D), lambda b, c: (b, c, 0)),      # y chunk
        pl.BlockSpec((1, 1, D), lambda b, c: (b, 0, 0)),      # hidden_next
    )
    out_shape = (
        jax.ShapeDtypeStruct((B, L, D), jnp.float32),
        jax.ShapeDtypeStruct((B, 1, D), jnp.float32),
    )
    fn = pl.pallas_call(
        kernel,
        grid=(B, NC),
        in_specs=in_specs,
        out_specs=out_specs,
        out_shape=out_shape,
        scratch_shapes=[pltpu.VMEM((1, D), jnp.float32)],     # carried state
        compiler_params=pltpu.CompilerParams(
            dimension_semantics=("parallel", "arbitrary"),
            vmem_limit_bytes=48 * 1024 * 1024),
    )
    y, hnext = fn(x_bf, h0, tril_f32, tril_bf, ind_hd, ind_dh,
                  params['wxp_bf'], params['bxp'],
                  params['wy_bf'], params['by'],
                  params['wdt_bf'], params['bdt'], params['neg_a'],
                  params['gamma_d'], params['beta_d'])
    return y, hnext.reshape(B, H, I)


def init_params(key, dim, num_head):
    inner = dim // num_head

    def xavier(k, out_f, in_f, gain):
        std = gain * math.sqrt(2.0 / (in_f + out_f))
        return std * jax.random.normal(k, (out_f, in_f), jnp.float32)

    ks = jax.random.split(key, 8)
    wz = xavier(ks[0], dim, dim, 0.01)
    wza = xavier(ks[1], dim, dim, 0.01)
    wy = xavier(ks[2], dim, dim, 0.01)
    wya = xavier(ks[3], dim, dim, 0.01)
    wdt = xavier(ks[4], num_head, dim, 0.01)
    ln_a = jnp.log(jax.random.uniform(ks[5], (num_head,), jnp.float32, 1.0, 16.0))
    dt = jnp.exp(jax.random.uniform(ks[6], (num_head,), jnp.float32,
                                    math.log(0.001), math.log(0.1)))
    inv_softplus_dt = dt + jnp.log(1.0 - jnp.exp(-dt))
    gamma = jnp.ones((num_head,), jnp.float32)
    beta = jnp.zeros((num_head,), jnp.float32)

    bz = jnp.zeros((1, dim), jnp.float32)
    bza = jnp.zeros((1, dim), jnp.float32)
    by = jnp.zeros((1, dim), jnp.float32)
    bya = jnp.zeros((1, dim), jnp.float32)

    p = {
        # f32 "PyTorch layout" (out, in) weights for the reference path
        'wz': wz, 'wza': wza, 'wy': wy, 'wya': wya, 'wdt': wdt,
        'bz': bz, 'bza': bza, 'by': by, 'bya': bya,
        'bdt': inv_softplus_dt.reshape(1, num_head),
        'ln_a': ln_a.reshape(1, num_head),
        'gamma': gamma.reshape(1, num_head),
        'beta': beta.reshape(1, num_head),
        # kernel-ready operands: (in, out) bf16 weights, lane-dense affine
        'wxp_bf': jnp.concatenate([wz.T, wza.T, wya.T], axis=1).astype(jnp.bfloat16),
        'bxp': jnp.concatenate([bz, bza, bya], axis=1),
        'wy_bf': wy.T.astype(jnp.bfloat16),
        'wdt_bf': wdt.T.astype(jnp.bfloat16),
        'neg_a': (-jnp.exp(ln_a)).reshape(1, num_head),
        'gamma_d': jnp.repeat(gamma, inner).reshape(1, dim),
        'beta_d': jnp.repeat(beta, inner).reshape(1, dim),
    }
    return p


def reference_forward(x, hidden, p):
    """Pure-JAX f32 replica of the PyTorch forward (validation reference)."""
    B, L, D = x.shape
    H = p['ln_a'].shape[1]
    I = D // H
    silu = lambda v: v * jax.nn.sigmoid(v)
    zp = x @ p['wz'].T + p['bz'][0]
    za = x @ p['wza'].T + p['bza'][0]
    z = (zp * silu(za)).reshape(B, L, H, I)
    dt = x @ p['wdt'].T + p['bdt'][0]
    ln_da = -jnp.exp(p['ln_a'][0]) * jax.nn.softplus(dt)              # (B, L, H)
    lm = jnp.broadcast_to(jnp.transpose(ln_da, (0, 2, 1))[:, :, :, None], (B, H, L, L))
    lm = lm * jnp.tril(jnp.ones((L, L), jnp.float32), -1)
    da = jnp.exp(jnp.cumsum(lm, axis=2)) * jnp.tril(jnp.ones((L, L), jnp.float32))
    h_inner = jnp.einsum('bhlm,bmhi->blhi', da, z)
    h_cross = jnp.einsum('blh,bhi->blhi', jnp.exp(jnp.cumsum(ln_da, axis=1)), hidden)
    h = h_inner + h_cross
    hidden_next = h[:, -1]
    hv = h.reshape(B * L, H, I)
    mean = hv.mean(-1, keepdims=True)
    var = ((hv - mean) ** 2).mean(-1, keepdims=True)
    hn = (hv - mean) / jnp.sqrt(var + 1e-5)
    hn = hn * p['gamma'][0][None, :, None] + p['beta'][0][None, :, None]
    h_norm = hn.reshape(B, L, D)
    y = (h_norm @ p['wy'].T + p['by'][0]) * silu(x @ p['wya'].T + p['bya'][0])
    return y, hidden_next


if __name__ == "__main__":
    B, L, D, H = 2, 16, 32, 4
    key = jax.random.PRNGKey(0)
    kx, kh, kp = jax.random.split(key, 3)
    x = jax.random.normal(kx, (B, L, D), jnp.float32)
    hidden = jax.random.normal(kh, (B, H, D // H), jnp.float32)
    params = init_params(kp, D, H)

    # chunk=8 -> 2 sequence chunks per batch element: exercises the carried
    # cross-chunk hidden state in the VMEM scratch.
    y, hidden_next = sconv_forward(x, hidden, params, chunk=8)
    jax.block_until_ready((y, hidden_next))

    y_ref, hn_ref = reference_forward(x, hidden, params)

    def rel_err(a, b):
        scale = jnp.maximum(jnp.max(jnp.abs(b)), 1e-6)
        return float(jnp.max(jnp.abs(a - b)) / scale)

    # bf16 MXU inputs -> relaxed (relative-to-max) tolerance vs f32 reference.
    ey = rel_err(y, y_ref)
    eh = rel_err(hidden_next, hn_ref)
    assert ey < 5e-2, f"y mismatch: rel-max err {ey}"
    assert eh < 5e-2, f"hidden mismatch: rel-max err {eh}"

    print("KERNEL_OK")
</pallas_src>

<mosaic_0001>
module attributes {stable_mosaic.version = 11 : i64} {
  func.func @sconv_kernel(%arg0: i32, %arg1: i32, %arg2: memref<1x8x32xbf16, #tpu.memory_space<vmem>>, %arg3: memref<1x1x32xf32, #tpu.memory_space<vmem>>, %arg4: memref<8x8xf32, #tpu.memory_space<vmem>>, %arg5: memref<8x8xbf16, #tpu.memory_space<vmem>>, %arg6: memref<4x32xf32, #tpu.memory_space<vmem>>, %arg7: memref<32x4xf32, #tpu.memory_space<vmem>>, %arg8: memref<32x96xbf16, #tpu.memory_space<vmem>>, %arg9: memref<1x96xf32, #tpu.memory_space<vmem>>, %arg10: memref<32x32xbf16, #tpu.memory_space<vmem>>, %arg11: memref<1x32xf32, #tpu.memory_space<vmem>>, %arg12: memref<32x4xbf16, #tpu.memory_space<vmem>>, %arg13: memref<1x4xf32, #tpu.memory_space<vmem>>, %arg14: memref<1x4xf32, #tpu.memory_space<vmem>>, %arg15: memref<1x32xf32, #tpu.memory_space<vmem>>, %arg16: memref<1x32xf32, #tpu.memory_space<vmem>>, %arg17: memref<1x8x32xf32, #tpu.memory_space<vmem>>, %arg18: memref<1x1x32xf32, #tpu.memory_space<vmem>>, %arg19: memref<1x32xf32, #tpu.memory_space<vmem>>) attributes {dimension_semantics = [#tpu.dimension_semantics<parallel>, #tpu.dimension_semantics<arbitrary>], iteration_bounds = array<i64: 2, 2>, scalar_prefetch = 0 : i64, scratch_operands = 1 : i64, tpu.core_type = #tpu.core_type<tc>, window_params = [{transform_indices = @transform_0, window_bounds = array<i64: 1, 8, 32>}, {transform_indices = @transform_1, window_bounds = array<i64: 1, 1, 32>}, {pipeline_mode = #tpu.pipeline_mode<synchronous>, transform_indices = @transform_2, window_bounds = array<i64: 8, 8>}, {pipeline_mode = #tpu.pipeline_mode<synchronous>, transform_indices = @transform_3, window_bounds = array<i64: 8, 8>}, {pipeline_mode = #tpu.pipeline_mode<synchronous>, transform_indices = @transform_4, window_bounds = array<i64: 4, 32>}, {pipeline_mode = #tpu.pipeline_mode<synchronous>, transform_indices = @transform_5, window_bounds = array<i64: 32, 4>}, {pipeline_mode = #tpu.pipeline_mode<synchronous>, transform_indices = @transform_6, window_bounds = array<i64: 32, 96>}, {pipeline_mode = #tpu.pipeline_mode<synchronous>, transform_indices = @transform_7, window_bounds = array<i64: 1, 96>}, {pipeline_mode = #tpu.pipeline_mode<synchronous>, transform_indices = @transform_8, window_bounds = array<i64: 32, 32>}, {pipeline_mode = #tpu.pipeline_mode<synchronous>, transform_indices = @transform_9, window_bounds = array<i64: 1, 32>}, {pipeline_mode = #tpu.pipeline_mode<synchronous>, transform_indices = @transform_10, window_bounds = array<i64: 32, 4>}, {pipeline_mode = #tpu.pipeline_mode<synchronous>, transform_indices = @transform_11, window_bounds = array<i64: 1, 4>}, {pipeline_mode = #tpu.pipeline_mode<synchronous>, transform_indices = @transform_12, window_bounds = array<i64: 1, 4>}, {pipeline_mode = #tpu.pipeline_mode<synchronous>, transform_indices = @transform_13, window_bounds = array<i64: 1, 32>}, {pipeline_mode = #tpu.pipeline_mode<synchronous>, transform_indices = @transform_14, window_bounds = array<i64: 1, 32>}, {transform_indices = @transform_15, window_bounds = array<i64: 1, 8, 32>}, {transform_indices = @transform_16, window_bounds = array<i64: 1, 1, 32>}]} {
    %c0 = arith.constant 0 : index
    %c0_0 = arith.constant 0 : index
    %c0_1 = arith.constant 0 : index
    %0 = vector.load %arg2[%c0, %c0_0, %c0_1] : memref<1x8x32xbf16, #tpu.memory_space<vmem>>, vector<1x8x32xbf16>
    %1 = vector.shape_cast %0 : vector<1x8x32xbf16> to vector<8x32xbf16>
    %c0_i32 = arith.constant 0 : i32
    %2 = arith.cmpi eq, %arg1, %c0_i32 : i32
    %3 = arith.extui %2 : i1 to i32
    %c0_i32_2 = arith.constant 0 : i32
    %4 = arith.cmpi ne, %3, %c0_i32_2 : i32
    scf.if %4 {
      %c0_61 = arith.constant 0 : index
      %c0_62 = arith.constant 0 : index
      %c0_63 = arith.constant 0 : index
      %115 = vector.load %arg3[%c0_61, %c0_62, %c0_63] : memref<1x1x32xf32, #tpu.memory_space<vmem>>, vector<1x1x32xf32>
      %116 = vector.shape_cast %115 : vector<1x1x32xf32> to vector<1x32xf32>
      %c0_64 = arith.constant 0 : index
      %c0_65 = arith.constant 0 : index
      %117 = vector.load %arg19[%c0_64, %c0_65] : memref<1x32xf32, #tpu.memory_space<vmem>>, vector<1x32xf32>
      tpu.vector_store %arg19[%c0_64, %c0_65], %116 {strides = array<i32>} : memref<1x32xf32, #tpu.memory_space<vmem>>, vector<1x32xf32>,
    } else {
    }
    %c0_3 = arith.constant 0 : index
    %c0_4 = arith.constant 0 : index
    %5 = vector.load %arg8[%c0_3, %c0_4] : memref<32x96xbf16, #tpu.memory_space<vmem>>, vector<32x96xbf16>
    %cst = arith.constant dense<0.000000e+00> : vector<8x96xf32>
    %6 = tpu.matmul %1, %5, %cst {dimension_numbers = #tpu.dot_dimension_numbers<[1], [0], [0], [1], [0, 0, 1, 1], [], []>} : vector<8x32xbf16>, vector<32x96xbf16>, vector<8x96xf32> -> vector<8x96xf32>
    %c0_5 = arith.constant 0 : index
    %c0_6 = arith.constant 0 : index
    %7 = vector.load %arg9[%c0_5, %c0_6] : memref<1x96xf32, #tpu.memory_space<vmem>>, vector<1x96xf32>
    %8 = vector.broadcast %7 : vector<1x96xf32> to vector<8x96xf32>
    %9 = arith.addf %6, %8 : vector<8x96xf32>
    %10 = vector.extract_strided_slice %9 {offsets = [0, 0], sizes = [8, 32], strides = [1, 1]} : vector<8x96xf32> to vector<8x32xf32>
    %11 = vector.extract_strided_slice %9 {offsets = [0, 32], sizes = [8, 32], strides = [1, 1]} : vector<8x96xf32> to vector<8x32xf32>
    %12 = vector.extract_strided_slice %9 {offsets = [0, 64], sizes = [8, 32], strides = [1, 1]} : vector<8x96xf32> to vector<8x32xf32>
    %cst_7 = arith.constant 0.000000e+00 : f32
    %13 = vector.broadcast %cst_7 : f32 to vector<8x32xf32>
    %14 = arith.subf %13, %11 : vector<8x32xf32>
    %15 = math.exp %14 : vector<8x32xf32>
    %cst_8 = arith.constant 1.000000e+00 : f32
    %16 = vector.broadcast %cst_8 : f32 to vector<8x32xf32>
    %17 = arith.addf %16, %15 : vector<8x32xf32>
    %18 = arith.divf %11, %17 : vector<8x32xf32>
    %19 = arith.mulf %10, %18 : vector<8x32xf32>
    %c0_9 = arith.constant 0 : index
    %c0_10 = arith.constant 0 : index
    %20 = vector.load %arg12[%c0_9, %c0_10] : memref<32x4xbf16, #tpu.memory_space<vmem>>, vector<32x4xbf16>
    %cst_11 = arith.constant dense<0.000000e+00> : vector<8x4xf32>
    %21 = tpu.matmul %1, %20, %cst_11 {dimension_numbers = #tpu.dot_dimension_numbers<[1], [0], [0], [1], [0, 0, 1, 1], [], []>} : vector<8x32xbf16>, vector<32x4xbf16>, vector<8x4xf32> -> vector<8x4xf32>
    %c0_12 = arith.constant 0 : index
    %c0_13 = arith.constant 0 : index
    %22 = vector.load %arg13[%c0_12, %c0_13] : memref<1x4xf32, #tpu.memory_space<vmem>>, vector<1x4xf32>
    %23 = vector.broadcast %22 : vector<1x4xf32> to vector<8x4xf32>
    %24 = arith.addf %21, %23 : vector<8x4xf32>
    %c0_14 = arith.constant 0 : index
    %c0_15 = arith.constant 0 : index
    %25 = vector.load %arg14[%c0_14, %c0_15] : memref<1x4xf32, #tpu.memory_space<vmem>>, vector<1x4xf32>
    %cst_16 = arith.constant 0.000000e+00 : f32
    %26 = vector.broadcast %cst_16 : f32 to vector<8x4xf32>
    %27 = arith.maximumf %24, %26 : vector<8x4xf32>
    %28 = vector.broadcast %cst_16 : f32 to vector<8x4xf32>
    %29 = arith.subf %24, %28 : vector<8x4xf32>
    %30 = arith.cmpf one, %29, %29 : vector<8x4xf32>
    %31 = vector.broadcast %cst_16 : f32 to vector<8x4xf32>
    %32 = arith.addf %24, %31 : vector<8x4xf32>
    %33 = math.absf %29 : vector<8x4xf32>
    %cst_17 = arith.constant 0.000000e+00 : f32
    %34 = vector.broadcast %cst_17 : f32 to vector<8x4xf32>
    %35 = arith.subf %34, %33 : vector<8x4xf32>
    %36 = math.exp %35 : vector<8x4xf32>
    %37 = math.log1p %36 : vector<8x4xf32>
    %38 = arith.addf %27, %37 : vector<8x4xf32>
    %39 = arith.select %30, %32, %38 : vector<8x4xi1>, vector<8x4xf32>
    %40 = vector.broadcast %25 : vector<1x4xf32> to vector<8x4xf32>
    %41 = arith.mulf %40, %39 : vector<8x4xf32>
    %c0_18 = arith.constant 0 : index
    %c0_19 = arith.constant 0 : index
    %42 = vector.load %arg4[%c0_18, %c0_19] : memref<8x8xf32, #tpu.memory_space<vmem>>, vector<8x8xf32>
    %cst_20 = arith.constant dense<0.000000e+00> : vector<8x4xf32>
    %43 = tpu.matmul %42, %41, %cst_20 {dimension_numbers = #tpu.dot_dimension_numbers<[1], [0], [0], [1], [0, 0, 1, 1], [], []>} : vector<8x8xf32>, vector<8x4xf32>, vector<8x4xf32> -> vector<8x4xf32>
    %44 = vector.extract_strided_slice %43 {offsets = [4, 0], sizes = [1, 4], strides = [1, 1]} : vector<8x4xf32> to vector<1x4xf32>
    %45 = vector.broadcast %44 : vector<1x4xf32> to vector<8x4xf32>
    %46 = arith.subf %43, %45 : vector<8x4xf32>
    %cst_21 = arith.constant -8.000000e+01 : f32
    %cst_22 = arith.constant 8.000000e+01 : f32
    %47 = vector.broadcast %cst_21 : f32 to vector<8x4xf32>
    %48 = arith.maximumf %47, %46 : vector<8x4xf32>
    %49 = vector.broadcast %cst_22 : f32 to vector<8x4xf32>
    %50 = arith.minimumf %49, %48 : vector<8x4xf32>
    %51 = math.exp %50 : vector<8x4xf32>
    %52 = vector.broadcast %44 : vector<1x4xf32> to vector<8x4xf32>
    %53 = arith.subf %52, %43 : vector<8x4xf32>
    %cst_23 = arith.constant -8.000000e+01 : f32
    %cst_24 = arith.constant 8.000000e+01 : f32
    %54 = vector.broadcast %cst_23 : f32 to vector<8x4xf32>
    %55 = arith.maximumf %54, %53 : vector<8x4xf32>
    %56 = vector.broadcast %cst_24 : f32 to vector<8x4xf32>
    %57 = arith.minimumf %56, %55 : vector<8x4xf32>
    %58 = math.exp %57 : vector<8x4xf32>
    %59 = math.exp %43 : vector<8x4xf32>
    %c0_25 = arith.constant 0 : index
    %c0_26 = arith.constant 0 : index
    %60 = vector.load %arg6[%c0_25, %c0_26] : memref<4x32xf32, #tpu.memory_space<vmem>>, vector<4x32xf32>
    %cst_27 = arith.constant dense<0.000000e+00> : vector<8x32xf32>
    %61 = tpu.matmul %51, %60, %cst_27 {dimension_numbers = #tpu.dot_dimension_numbers<[1], [0], [0], [1], [0, 0, 1, 1], [], []>} : vector<8x4xf32>, vector<4x32xf32>, vector<8x32xf32> -> vector<8x32xf32>
    %cst_28 = arith.constant dense<0.000000e+00> : vector<8x32xf32>
    %62 = tpu.matmul %58, %60, %cst_28 {dimension_numbers = #tpu.dot_dimension_numbers<[1], [0], [0], [1], [0, 0, 1, 1], [], []>} : vector<8x4xf32>, vector<4x32xf32>, vector<8x32xf32> -> vector<8x32xf32>
    %cst_29 = arith.constant dense<0.000000e+00> : vector<8x32xf32>
    %63 = tpu.matmul %59, %60, %cst_29 {dimension_numbers = #tpu.dot_dimension_numbers<[1], [0], [0], [1], [0, 0, 1, 1], [], []>} : vector<8x4xf32>, vector<4x32xf32>, vector<8x32xf32> -> vector<8x32xf32>
    %64 = arith.mulf %19, %62 : vector<8x32xf32>
    %65 = arith.truncf %64 : vector<8x32xf32> to vector<8x32xbf16>
    %c0_30 = arith.constant 0 : index
    %c0_31 = arith.constant 0 : index
    %66 = vector.load %arg5[%c0_30, %c0_31] : memref<8x8xbf16, #tpu.memory_space<vmem>>, vector<8x8xbf16>
    %cst_32 = arith.constant dense<0.000000e+00> : vector<8x32xf32>
    %67 = tpu.matmul %66, %65, %cst_32 {dimension_numbers = #tpu.dot_dimension_numbers<[1], [0], [0], [1], [0, 0, 1, 1], [], []>} : vector<8x8xbf16>, vector<8x32xbf16>, vector<8x32xf32> -> vector<8x32xf32>
    %c0_33 = arith.constant 0 : index
    %c0_34 = arith.constant 0 : index
    %68 = vector.load %arg19[%c0_33, %c0_34] : memref<1x32xf32, #tpu.memory_space<vmem>>, vector<1x32xf32>
    %69 = arith.mulf %61, %67 : vector<8x32xf32>
    %70 = vector.broadcast %68 : vector<1x32xf32> to vector<8x32xf32>
    %71 = arith.mulf %63, %70 : vector<8x32xf32>
    %72 = arith.addf %69, %71 : vector<8x32xf32>
    %73 = vector.extract_strided_slice %72 {offsets = [7, 0], sizes = [1, 32], strides = [1, 1]} : vector<8x32xf32> to vector<1x32xf32>
    %c0_35 = arith.constant 0 : index
    %c0_36 = arith.constant 0 : index
    %74 = vector.load %arg19[%c0_35, %c0_36] : memref<1x32xf32, #tpu.memory_space<vmem>>, vector<1x32xf32>
    tpu.vector_store %arg19[%c0_35, %c0_36], %73 {strides = array<i32>} : memref<1x32xf32, #tpu.memory_space<vmem>>, vector<1x32xf32>,
    %c1_i32 = arith.constant 1 : i32
    %75 = arith.cmpi eq, %arg1, %c1_i32 : i32
    %76 = arith.extui %75 : i1 to i32
    %c0_i32_37 = arith.constant 0 : i32
    %77 = arith.cmpi ne, %76, %c0_i32_37 : i32
    scf.if %77 {
      %c0_61 = arith.constant 0 : index
      %c0_62 = arith.constant 0 : index
      %c0_63 = arith.constant 0 : index
      %115 = vector.load %arg18[%c0_61, %c0_62, %c0_63] : memref<1x1x32xf32, #tpu.memory_space<vmem>>, vector<1x1x32xf32>
      %116 = vector.shape_cast %115 : vector<1x1x32xf32> to vector<1x32xf32>
      %117 = vector.shape_cast %73 : vector<1x32xf32> to vector<1x1x32xf32>
      tpu.vector_store %arg18[%c0_61, %c0_62, %c0_63], %117 {strides = array<i32>} : memref<1x1x32xf32, #tpu.memory_space<vmem>>, vector<1x1x32xf32>,
    } else {
    }
    %c0_38 = arith.constant 0 : index
    %c0_39 = arith.constant 0 : index
    %78 = vector.load %arg7[%c0_38, %c0_39] : memref<32x4xf32, #tpu.memory_space<vmem>>, vector<32x4xf32>
    %cst_40 = arith.constant dense<0.000000e+00> : vector<8x4xf32>
    %79 = tpu.matmul %72, %78, %cst_40 {dimension_numbers = #tpu.dot_dimension_numbers<[1], [0], [0], [1], [0, 0, 1, 1], [], []>} : vector<8x32xf32>, vector<32x4xf32>, vector<8x4xf32> -> vector<8x4xf32>
    %cst_41 = arith.constant 1.250000e-01 : f32
    %80 = vector.broadcast %cst_41 : f32 to vector<8x4xf32>
    %81 = arith.mulf %79, %80 : vector<8x4xf32>
    %cst_42 = arith.constant dense<0.000000e+00> : vector<8x32xf32>
    %82 = tpu.matmul %81, %60, %cst_42 {dimension_numbers = #tpu.dot_dimension_numbers<[1], [0], [0], [1], [0, 0, 1, 1], [], []>} : vector<8x4xf32>, vector<4x32xf32>, vector<8x32xf32> -> vector<8x32xf32>
    %83 = arith.subf %72, %82 : vector<8x32xf32>
    %84 = arith.mulf %83, %83 : vector<8x32xf32>
    %cst_43 = arith.constant dense<0.000000e+00> : vector<8x4xf32>
    %85 = tpu.matmul %84, %78, %cst_43 {dimension_numbers = #tpu.dot_dimension_numbers<[1], [0], [0], [1], [0, 0, 1, 1], [], []>} : vector<8x32xf32>, vector<32x4xf32>, vector<8x4xf32> -> vector<8x4xf32>
    %cst_44 = arith.constant 1.250000e-01 : f32
    %86 = vector.broadcast %cst_44 : f32 to vector<8x4xf32>
    %87 = arith.mulf %85, %86 : vector<8x4xf32>
    %cst_45 = arith.constant 9.99999974E-6 : f32
    %88 = vector.broadcast %cst_45 : f32 to vector<8x4xf32>
    %89 = arith.addf %87, %88 : vector<8x4xf32>
    %90 = math.rsqrt %89 : vector<8x4xf32>
    %cst_46 = arith.constant dense<0.000000e+00> : vector<8x32xf32>
    %91 = tpu.matmul %90, %60, %cst_46 {dimension_numbers = #tpu.dot_dimension_numbers<[1], [0], [0], [1], [0, 0, 1, 1], [], []>} : vector<8x4xf32>, vector<4x32xf32>, vector<8x32xf32> -> vector<8x32xf32>
    %92 = arith.mulf %83, %91 : vector<8x32xf32>
    %c0_47 = arith.constant 0 : index
    %c0_48 = arith.constant 0 : index
    %93 = vector.load %arg15[%c0_47, %c0_48] : memref<1x32xf32, #tpu.memory_space<vmem>>, vector<1x32xf32>
    %94 = vector.broadcast %93 : vector<1x32xf32> to vector<8x32xf32>
    %95 = arith.mulf %92, %94 : vector<8x32xf32>
    %c0_49 = arith.constant 0 : index
    %c0_50 = arith.constant 0 : index
    %96 = vector.load %arg16[%c0_49, %c0_50] : memref<1x32xf32, #tpu.memory_space<vmem>>, vector<1x32xf32>
    %97 = vector.broadcast %96 : vector<1x32xf32> to vector<8x32xf32>
    %98 = arith.addf %95, %97 : vector<8x32xf32>
    %99 = arith.truncf %98 : vector<8x32xf32> to vector<8x32xbf16>
    %c0_51 = arith.constant 0 : index
    %c0_52 = arith.constant 0 : index
    %100 = vector.load %arg10[%c0_51, %c0_52] : memref<32x32xbf16, #tpu.memory_space<vmem>>, vector<32x32xbf16>
    %cst_53 = arith.constant dense<0.000000e+00> : vector<8x32xf32>
    %101 = tpu.matmul %99, %100, %cst_53 {dimension_numbers = #tpu.dot_dimension_numbers<[1], [0], [0], [1], [0, 0, 1, 1], [], []>} : vector<8x32xbf16>, vector<32x32xbf16>, vector<8x32xf32> -> vector<8x32xf32>
    %c0_54 = arith.constant 0 : index
    %c0_55 = arith.constant 0 : index
    %102 = vector.load %arg11[%c0_54, %c0_55] : memref<1x32xf32, #tpu.memory_space<vmem>>, vector<1x32xf32>
    %103 = vector.broadcast %102 : vector<1x32xf32> to vector<8x32xf32>
    %104 = arith.addf %101, %103 : vector<8x32xf32>
    %cst_56 = arith.constant 0.000000e+00 : f32
    %105 = vector.broadcast %cst_56 : f32 to vector<8x32xf32>
    %106 = arith.subf %105, %12 : vector<8x32xf32>
    %107 = math.exp %106 : vector<8x32xf32>
    %cst_57 = arith.constant 1.000000e+00 : f32
    %108 = vector.broadcast %cst_57 : f32 to vector<8x32xf32>
    %109 = arith.addf %108, %107 : vector<8x32xf32>
    %110 = arith.divf %12, %109 : vector<8x32xf32>
    %111 = arith.mulf %104, %110 : vector<8x32xf32>
    %c0_58 = arith.constant 0 : index
    %c0_59 = arith.constant 0 : index
    %c0_60 = arith.constant 0 : index
    %112 = vector.load %arg17[%c0_58, %c0_59, %c0_60] : memref<1x8x32xf32, #tpu.memory_space<vmem>>, vector<1x8x32xf32>
    %113 = vector.shape_cast %112 : vector<1x8x32xf32> to vector<8x32xf32>
    %114 = vector.shape_cast %111 : vector<8x32xf32> to vector<1x8x32xf32>
    tpu.vector_store %arg17[%c0_58, %c0_59, %c0_60], %114 {strides = array<i32>} : memref<1x8x32xf32, #tpu.memory_space<vmem>>, vector<1x8x32xf32>,
    return
  }
  func.func @transform_0(%arg0: i32, %arg1: i32) -> (i32, i32, i32) {
    %c0_i32 = arith.constant 0 : i32
    %c0_i32_0 = arith.constant 0 : i32
    return %arg0, %arg1, %c0_i32 : i32, i32, i32
  }
  func.func @transform_1(%arg0: i32, %arg1: i32) -> (i32, i32, i32) {
    %c0_i32 = arith.constant 0 : i32
    %c0_i32_0 = arith.constant 0 : i32
    %c0_i32_1 = arith.constant 0 : i32
    return %arg0, %c0_i32, %c0_i32_0 : i32, i32, i32
  }
  func.func @transform_2(%arg0: i32, %arg1: i32) -> (i32, i32) {
    %c0_i32 = arith.constant 0 : i32
    %c0_i32_0 = arith.constant 0 : i32
    %c0_i32_1 = arith.constant 0 : i32
    return %c0_i32, %c0_i32_0 : i32, i32
  }
  func.func @transform_3(%arg0: i32, %arg1: i32) -> (i32, i32) {
    %c0_i32 = arith.constant 0 : i32
    %c0_i32_0 = arith.constant 0 : i32
    %c0_i32_1 = arith.constant 0 : i32
    return %c0_i32, %c0_i32_0 : i32, i32
  }
  func.func @transform_4(%arg0: i32, %arg1: i32) -> (i32, i32) {
    %c0_i32 = arith.constant 0 : i32
    %c0_i32_0 = arith.constant 0 : i32
    %c0_i32_1 = arith.constant 0 : i32
    return %c0_i32, %c0_i32_0 : i32, i32
  }
  func.func @transform_5(%arg0: i32, %arg1: i32) -> (i32, i32) {
    %c0_i32 = arith.constant 0 : i32
    %c0_i32_0 = arith.constant 0 : i32
    %c0_i32_1 = arith.constant 0 : i32
    return %c0_i32, %c0_i32_0 : i32, i32
  }
  func.func @transform_6(%arg0: i32, %arg1: i32) -> (i32, i32) {
    %c0_i32 = arith.constant 0 : i32
    %c0_i32_0 = arith.constant 0 : i32
    %c0_i32_1 = arith.constant 0 : i32
    return %c0_i32, %c0_i32_0 : i32, i32
  }
  func.func @transform_7(%arg0: i32, %arg1: i32) -> (i32, i32) {
    %c0_i32 = arith.constant 0 : i32
    %c0_i32_0 = arith.constant 0 : i32
    %c0_i32_1 = arith.constant 0 : i32
    return %c0_i32, %c0_i32_0 : i32, i32
  }
  func.func @transform_8(%arg0: i32, %arg1: i32) -> (i32, i32) {
    %c0_i32 = arith.constant 0 : i32
    %c0_i32_0 = arith.constant 0 : i32
    %c0_i32_1 = arith.constant 0 : i32
    return %c0_i32, %c0_i32_0 : i32, i32
  }
  func.func @transform_9(%arg0: i32, %arg1: i32) -> (i32, i32) {
    %c0_i32 = arith.constant 0 : i32
    %c0_i32_0 = arith.constant 0 : i32
    %c0_i32_1 = arith.constant 0 : i32
    return %c0_i32, %c0_i32_0 : i32, i32
  }
  func.func @transform_10(%arg0: i32, %arg1: i32) -> (i32, i32) {
    %c0_i32 = arith.constant 0 : i32
    %c0_i32_0 = arith.constant 0 : i32
    %c0_i32_1 = arith.constant 0 : i32
    return %c0_i32, %c0_i32_0 : i32, i32
  }
  func.func @transform_11(%arg0: i32, %arg1: i32) -> (i32, i32) {
    %c0_i32 = arith.constant 0 : i32
    %c0_i32_0 = arith.constant 0 : i32
    %c0_i32_1 = arith.constant 0 : i32
    return %c0_i32, %c0_i32_0 : i32, i32
  }
  func.func @transform_12(%arg0: i32, %arg1: i32) -> (i32, i32) {
    %c0_i32 = arith.constant 0 : i32
    %c0_i32_0 = arith.constant 0 : i32
    %c0_i32_1 = arith.constant 0 : i32
    return %c0_i32, %c0_i32_0 : i32, i32
  }
  func.func @transform_13(%arg0: i32, %arg1: i32) -> (i32, i32) {
    %c0_i32 = arith.constant 0 : i32
    %c0_i32_0 = arith.constant 0 : i32
    %c0_i32_1 = arith.constant 0 : i32
    return %c0_i32, %c0_i32_0 : i32, i32
  }
  func.func @transform_14(%arg0: i32, %arg1: i32) -> (i32, i32) {
    %c0_i32 = arith.constant 0 : i32
    %c0_i32_0 = arith.constant 0 : i32
    %c0_i32_1 = arith.constant 0 : i32
    return %c0_i32, %c0_i32_0 : i32, i32
  }
  func.func @transform_15(%arg0: i32, %arg1: i32) -> (i32, i32, i32) {
    %c0_i32 = arith.constant 0 : i32
    %c0_i32_0 = arith.constant 0 : i32
    return %arg0, %arg1, %c0_i32 : i32, i32, i32
  }
  func.func @transform_16(%arg0: i32, %arg1: i32) -> (i32, i32, i32) {
    %c0_i32 = arith.constant 0 : i32
    %c0_i32_0 = arith.constant 0 : i32
    %c0_i32_1 = arith.constant 0 : i32
    return %arg0, %c0_i32, %c0_i32_0 : i32, i32, i32
  }
}

</mosaic_0001>

<llo_original>
// kernel: tpu_custom_call.1
$region0: #{tpu_custom_call.1}
  #allocation0 [shape = 'u32[]', space=smem, size = 0x4, offset = 0x4, fixed_abs, tag = 'smem constant byte address 0x4 - core index']
  #allocation1 [shape = 'u32[144,128]{1,0:T(1,128)}', space=vmem, size = 0x12000, scoped, tag = 'internal scratch']
  #allocation2 [shape = 'f32[1,32]{1,0:T(1,128)}', space=vmem, size = 0x200, scoped, tag = 'scratch operand']
  %s0 = inlined_call_operand.vmem [shape: bf16[2,16,32], index: 0, kind: input, shape index: {}]
  %s1 = inlined_call_operand.hbm [shape: f32[2,1,32], index: 1, kind: input, shape index: {}]
  %s2 = inlined_call_operand.vmem [shape: f32[8,8], index: 2, kind: input, shape index: {}]
  %s3 = inlined_call_operand.hbm [shape: bf16[8,8], index: 3, kind: input, shape index: {}]
  %s4 = inlined_call_operand.hbm [shape: f32[4,32], index: 4, kind: input, shape index: {}]
  %s5 = inlined_call_operand.vmem [shape: f32[32,4], index: 5, kind: input, shape index: {}]
  %s6 = inlined_call_operand.vmem [shape: bf16[32,96], index: 6, kind: input, shape index: {}]
  %s7 = inlined_call_operand.vmem [shape: f32[1,96], index: 7, kind: input, shape index: {}]
  %s8 = inlined_call_operand.vmem [shape: bf16[32,32], index: 8, kind: input, shape index: {}]
  %s9 = inlined_call_operand.vmem [shape: f32[1,32], index: 9, kind: input, shape index: {}]
  %s10 = inlined_call_operand.vmem [shape: bf16[32,4], index: 10, kind: input, shape index: {}]
  %s11 = inlined_call_operand.vmem [shape: f32[1,4], index: 11, kind: input, shape index: {}]
  %s12 = inlined_call_operand.vmem [shape: f32[1,4], index: 12, kind: input, shape index: {}]
  %s13 = inlined_call_operand.vmem [shape: f32[1,32], index: 13, kind: input, shape index: {}]
  %s14 = inlined_call_operand.vmem [shape: f32[1,32], index: 14, kind: input, shape index: {}]
  %s15 = inlined_call_operand.hbm [shape: f32[2,16,32], index: 15, kind: output, shape index: {0}]
  %s16 = inlined_call_operand.hbm [shape: f32[2,1,32], index: 16, kind: output, shape index: {1}]
  %17 = xla_tuple %s15, %s16
  %s18 = sld [smem:[#allocation0]]
  $region121: #{tpu_custom_call.1} parent=0
    _
  %s20 = ssub.s32 1, %s18
  %s21 = scalar_select 0, %s20, %s18
  $region1: #{tpu_custom_call.1} parent=0
    #allocation3 [shape = 'u8[1024]{0}', space=vmem, size = 0x400, scoped, tag = 'input window, operand 1']
    #allocation4 [shape = 's32[2]{0}', space=sflag, size = 0x8, scoped, tag = 'scoped memory for tpu_custom_call.1']
    #allocation5 [shape = 's32[2]{0}', space=sflag, size = 0x8, scoped, tag = 'scoped memory for tpu_custom_call.1']
    #allocation6 [shape = 'u8[2048]{0}', space=vmem, size = 0x800, scoped, tag = 'input window, operand 3, single buffered']
    #allocation7 [shape = 's32[1]{0}', space=sflag, size = 0x4, scoped, tag = 'scoped memory for tpu_custom_call.1']
    #allocation8 [shape = 'u8[2048]{0}', space=vmem, size = 0x800, scoped, tag = 'input window, operand 4, single buffered']
    #allocation9 [shape = 'u8[8192]{0}', space=vmem, size = 0x2000, scoped, tag = 'output window, operand 0']
    #allocation10 [shape = 'u8[1024]{0}', space=vmem, size = 0x400, scoped, tag = 'output window, operand 1']
    #allocation11 [shape = 's32[2]{0}', space=sflag, size = 0x8, scoped, tag = 'scoped memory for tpu_custom_call.1']
    %22 = vsyncpa [#allocation4], 0
    %s23 = scalar_lea.sflag [#allocation4], 1
    %24 = vsyncpa %s23, 0
    %25 = vsyncpa [#allocation7], 0
    %26 = vsyncpa [#allocation5], 0
    %s27 = scalar_lea.sflag [#allocation5], 1
    %28 = vsyncpa %s27, 0
    %29 = vsyncpa [#allocation11], 0
    %s30 = scalar_lea.sflag [#allocation11], 1
    %31 = vsyncpa %s30, 0
    loop: start=0, step=1, limit=6
    $region2: #{tpu_custom_call.1} parent=1 // loop_pre_header
      _
    $region3: #{tpu_custom_call.1} parent=1 // loop_header
      %s33 = sphi 0, %s37
      %p34 = scmp.ge.s32.totalorder %s33, 6
      %s40 = sphi 0, %s52
      %s41 = sphi 0, %s48
      %s42 = sphi 0, %s40
      %s43 = sphi 0, %s41
      %s44 = sphi 0, %s42
      %s45 = sphi 0, %s43
      %s57 = sphi 0, %s59
      %s60 = sphi 0, %s57
      %s61 = sphi 0, %s60
      %s77 = sphi 0, %s61
      %s83 = sphi 0, %s85
      %s86 = sphi 0, %s83
      %s87 = sphi 0, %s86
      %s103 = sphi 0, %s87
      %s107 = sphi 0, %s107
      %s109 = sphi 0, %s107
      %s110 = sphi 0, %s109
      %s124 = sphi 0, %s110
      %s128 = sphi 0, %s128
      %s130 = sphi 0, %s128
      %s131 = sphi 0, %s130
      %s145 = sphi 0, %s131
      %s149 = sphi 0, %s149
      %s151 = sphi 0, %s149
      %s152 = sphi 0, %s151
      %s166 = sphi 0, %s152
      %s170 = sphi 0, %s170
      %s172 = sphi 0, %s170
      %s173 = sphi 0, %s172
      %s187 = sphi 0, %s173
      %s191 = sphi 0, %s191
      %s193 = sphi 0, %s191
      %s194 = sphi 0, %s193
      %s208 = sphi 0, %s194
      %s212 = sphi 0, %s212
      %s214 = sphi 0, %s212
      %s215 = sphi 0, %s214
      %s229 = sphi 0, %s215
      %s233 = sphi 0, %s233
      %s235 = sphi 0, %s233
      %s236 = sphi 0, %s235
      %s250 = sphi 0, %s236
      %s254 = sphi 0, %s254
      %s256 = sphi 0, %s254
      %s257 = sphi 0, %s256
      %s271 = sphi 0, %s257
      %s275 = sphi 0, %s275
      %s277 = sphi 0, %s275
      %s278 = sphi 0, %s277
      %s292 = sphi 0, %s278
      %s296 = sphi 0, %s296
      %s298 = sphi 0, %s296
      %s299 = sphi 0, %s298
      %s313 = sphi 0, %s299
      %s317 = sphi 0, %s317
      %s319 = sphi 0, %s317
      %s320 = sphi 0, %s319
      %s334 = sphi 0, %s320
      %s338 = sphi 0, %s338
      %s340 = sphi 0, %s338
      %s341 = sphi 0, %s340
      %s355 = sphi 0, %s341
      %s359 = sphi 0, %s359
      %s361 = sphi 0, %s359
      %s362 = sphi 0, %s361
      %s376 = sphi 0, %s362
      %s384 = sphi 0, %s386
      %s387 = sphi 0, %s384
      %s388 = sphi 0, %s387
      %s404 = sphi 0, %s388
      %s410 = sphi 0, %s412
      %s413 = sphi 0, %s410
      %s414 = sphi 0, %s413
      %s430 = sphi 0, %s414
    $region4: #{tpu_custom_call.1} parent=1 // loop_header_branch
      %36 = sbr.rel (%p34) target = $region8
    $region5: #{tpu_custom_call.1} parent=1 // loop_body
      %s38 = ssub.s32 %s33, 1
      %s39 = ssub.s32 %s33, 2
      %s46 = sadd.s32 1, %s41
      %p47 = scmp.ge.s32.totalorder %s46, 2
      %s48 = scalar_select %p47, 0, %s46
      %s49 = sadd.s32 1, %s40
      %s50 = scalar_select %p47, %s49, %s40
      %p51 = scmp.ge.s32.totalorder %s50, 2
      %s52 = scalar_select %p51, 0, %s50
      %s53 = ssub.s32 %s40, %s52
      %s54 = ssub.s32 %s41, %s48
      %s55 = sor.u32 %s53, %s54
      %p56 = scmp.eq.s32.totalorder %s55, 0
      %s58 = sadd.s32 %s57, 1
      %s59 = scalar_select %p56, %s57, %s58
      %p62 = pneg %p56
      %p63 = scmp.eq.s32.totalorder %s33, 3
      %p64 = por %p62, %p63
      %p65 = scmp.ne.s32.totalorder %s57, %s60
      %p66 = scmp.eq.s32.totalorder %s33, 0
      %p67 = por %p65, %p66
      %p68 = scmp.ne.s32.totalorder %s57, %s60
      %p69 = scmp.eq.s32.totalorder %s38, 3
      %p70 = por %p68, %p69
      %p71 = scmp.ne.s32.totalorder %s60, %s61
      %p72 = scmp.eq.s32.totalorder %s38, 0
      %p73 = por %p71, %p72
      %p74 = scmp.ne.s32.totalorder %s60, %s61
      %p75 = scmp.eq.s32.totalorder %s39, 3
      %p76 = por %p74, %p75
      %p78 = scmp.ne.s32.totalorder %s61, %s77
      %p79 = scmp.eq.s32.totalorder %s39, 0
      %p80 = por %p78, %p79
      %s81 = ssub.s32 %s40, %s52
      %p82 = scmp.eq.s32.totalorder %s81, 0
      %s84 = sadd.s32 %s83, 1
      %s85 = scalar_select %p82, %s83, %s84
      %p88 = pneg %p82
      %p89 = scmp.eq.s32.totalorder %s33, 3
      %p90 = por %p88, %p89
      %p91 = scmp.ne.s32.totalorder %s83, %s86
      %p92 = scmp.eq.s32.totalorder %s33, 0
      %p93 = por %p91, %p92
      %p94 = scmp.ne.s32.totalorder %s83, %s86
      %p95 = scmp.eq.s32.totalorder %s38, 3
      %p96 = por %p94, %p95
      %p97 = scmp.ne.s32.totalorder %s86, %s87
      %p98 = scmp.eq.s32.totalorder %s38, 0
      %p99 = por %p97, %p98
      %p100 = scmp.ne.s32.totalorder %s86, %s87
      %p101 = scmp.eq.s32.totalorder %s39, 3
      %p102 = por %p100, %p101
      %p104 = scmp.ne.s32.totalorder %s87, %s103
      %p105 = scmp.eq.s32.totalorder %s39, 0
      %p106 = por %p104, %p105
      %s108 = sadd.s32 %s107, 1
      %p111 = scmp.eq.s32.totalorder %s33, 3
      %p112 = scmp.ne.s32.totalorder %s107, %s109
      %p113 = scmp.eq.s32.totalorder %s33, 0
      %p114 = por %p112, %p113
      %p115 = scmp.ne.s32.totalorder %s107, %s109
      %p116 = scmp.eq.s32.totalorder %s38, 3
      %p117 = por %p115, %p116
      %p118 = scmp.ne.s32.totalorder %s109, %s110
      %p119 = scmp.eq.s32.totalorder %s38, 0
      %p120 = por %p118, %p119
      %p121 = scmp.ne.s32.totalorder %s109, %s110
      %p122 = scmp.eq.s32.totalorder %s39, 3
      %p123 = por %p121, %p122
      %p125 = scmp.ne.s32.totalorder %s110, %s124
      %p126 = scmp.eq.s32.totalorder %s39, 0
      %p127 = por %p125, %p126
      %s129 = sadd.s32 %s128, 1
      %p132 = scmp.eq.s32.totalorder %s33, 3
      %p133 = scmp.ne.s32.totalorder %s128, %s130
      %p134 = scmp.eq.s32.totalorder %s33, 0
      %p135 = por %p133, %p134
      %p136 = scmp.ne.s32.totalorder %s128, %s130
      %p137 = scmp.eq.s32.totalorder %s38, 3
      %p138 = por %p136, %p137
      %p139 = scmp.ne.s32.totalorder %s130, %s131
      %p140 = scmp.eq.s32.totalorder %s38, 0
      %p141 = por %p139, %p140
      %p142 = scmp.ne.s32.totalorder %s130, %s131
      %p143 = scmp.eq.s32.totalorder %s39, 3
      %p144 = por %p142, %p143
      %p146 = scmp.ne.s32.totalorder %s131, %s145
      %p147 = scmp.eq.s32.totalorder %s39, 0
      %p148 = por %p146, %p147
      %s150 = sadd.s32 %s149, 1
      %p153 = scmp.eq.s32.totalorder %s33, 3
      %p154 = scmp.ne.s32.totalorder %s149, %s151
      %p155 = scmp.eq.s32.totalorder %s33, 0
      %p156 = por %p154, %p155
      %p157 = scmp.ne.s32.totalorder %s149, %s151
      %p158 = scmp.eq.s32.totalorder %s38, 3
      %p159 = por %p157, %p158
      %p160 = scmp.ne.s32.totalorder %s151, %s152
      %p161 = scmp.eq.s32.totalorder %s38, 0
      %p162 = por %p160, %p161
      %p163 = scmp.ne.s32.totalorder %s151, %s152
      %p164 = scmp.eq.s32.totalorder %s39, 3
      %p165 = por %p163, %p164
      %p167 = scmp.ne.s32.totalorder %s152, %s166
      %p168 = scmp.eq.s32.totalorder %s39, 0
      %p169 = por %p167, %p168
      %s171 = sadd.s32 %s170, 1
      %p174 = scmp.eq.s32.totalorder %s33, 3
      %p175 = scmp.ne.s32.totalorder %s170, %s172
      %p176 = scmp.eq.s32.totalorder %s33, 0
      %p177 = por %p175, %p176
      %p178 = scmp.ne.s32.totalorder %s170, %s172
      %p179 = scmp.eq.s32.totalorder %s38, 3
      %p180 = por %p178, %p179
      %p181 = scmp.ne.s32.totalorder %s172, %s173
      %p182 = scmp.eq.s32.totalorder %s38, 0
      %p183 = por %p181, %p182
      %p184 = scmp.ne.s32.totalorder %s172, %s173
      %p185 = scmp.eq.s32.totalorder %s39, 3
      %p186 = por %p184, %p185
      %p188 = scmp.ne.s32.totalorder %s173, %s187
      %p189 = scmp.eq.s32.totalorder %s39, 0
      %p190 = por %p188, %p189
      %s192 = sadd.s32 %s191, 1
      %p195 = scmp.eq.s32.totalorder %s33, 3
      %p196 = scmp.ne.s32.totalorder %s191, %s193
      %p197 = scmp.eq.s32.totalorder %s33, 0
      %p198 = por %p196, %p197
      %p199 = scmp.ne.s32.totalorder %s191, %s193
      %p200 = scmp.eq.s32.totalorder %s38, 3
      %p201 = por %p199, %p200
      %p202 = scmp.ne.s32.totalorder %s193, %s194
      %p203 = scmp.eq.s32.totalorder %s38, 0
      %p204 = por %p202, %p203
      %p205 = scmp.ne.s32.totalorder %s193, %s194
      %p206 = scmp.eq.s32.totalorder %s39, 3
      %p207 = por %p205, %p206
      %p209 = scmp.ne.s32.totalorder %s194, %s208
      %p210 = scmp.eq.s32.totalorder %s39, 0
      %p211 = por %p209, %p210
      %s213 = sadd.s32 %s212, 1
      %p216 = scmp.eq.s32.totalorder %s33, 3
      %p217 = scmp.ne.s32.totalorder %s212, %s214
      %p218 = scmp.eq.s32.totalorder %s33, 0
      %p219 = por %p217, %p218
      %p220 = scmp.ne.s32.totalorder %s212, %s214
      %p221 = scmp.eq.s32.totalorder %s38, 3
      %p222 = por %p220, %p221
      %p223 = scmp.ne.s32.totalorder %s214, %s215
      %p224 = scmp.eq.s32.totalorder %s38, 0
      %p225 = por %p223, %p224
      %p226 = scmp.ne.s32.totalorder %s214, %s215
      %p227 = scmp.eq.s32.totalorder %s39, 3
      %p228 = por %p226, %p227
      %p230 = scmp.ne.s32.totalorder %s215, %s229
      %p231 = scmp.eq.s32.totalorder %s39, 0
      %p232 = por %p230, %p231
      %s234 = sadd.s32 %s233, 1
      %p237 = scmp.eq.s32.totalorder %s33, 3
      %p238 = scmp.ne.s32.totalorder %s233, %s235
      %p239 = scmp.eq.s32.totalorder %s33, 0
      %p240 = por %p238, %p239
      %p241 = scmp.ne.s32.totalorder %s233, %s235
      %p242 = scmp.eq.s32.totalorder %s38, 3
      %p243 = por %p241, %p242
      %p244 = scmp.ne.s32.totalorder %s235, %s236
      %p245 = scmp.eq.s32.totalorder %s38, 0
      %p246 = por %p244, %p245
      %p247 = scmp.ne.s32.totalorder %s235, %s236
      %p248 = scmp.eq.s32.totalorder %s39, 3
      %p249 = por %p247, %p248
      %p251 = scmp.ne.s32.totalorder %s236, %s250
      %p252 = scmp.eq.s32.totalorder %s39, 0
      %p253 = por %p251, %p252
      %s255 = sadd.s32 %s254, 1
      %p258 = scmp.eq.s32.totalorder %s33, 3
      %p259 = scmp.ne.s32.totalorder %s254, %s256
      %p260 = scmp.eq.s32.totalorder %s33, 0
      %p261 = por %p259, %p260
      %p262 = scmp.ne.s32.totalorder %s254, %s256
      %p263 = scmp.eq.s32.totalorder %s38, 3
      %p264 = por %p262, %p263
      %p265 = scmp.ne.s32.totalorder %s256, %s257
      %p266 = scmp.eq.s32.totalorder %s38, 0
      %p267 = por %p265, %p266
      %p268 = scmp.ne.s32.totalorder %s256, %s257
      %p269 = scmp.eq.s32.totalorder %s39, 3
      %p270 = por %p268, %p269
      %p272 = scmp.ne.s32.totalorder %s257, %s271
      %p273 = scmp.eq.s32.totalorder %s39, 0
      %p274 = por %p272, %p273
      %s276 = sadd.s32 %s275, 1
      %p279 = scmp.eq.s32.totalorder %s33, 3
      %p280 = scmp.ne.s32.totalorder %s275, %s277
      %p281 = scmp.eq.s32.totalorder %s33, 0
      %p282 = por %p280, %p281
      %p283 = scmp.ne.s32.totalorder %s275, %s277
      %p284 = scmp.eq.s32.totalorder %s38, 3
      %p285 = por %p283, %p284
      %p286 = scmp.ne.s32.totalorder %s277, %s278
      %p287 = scmp.eq.s32.totalorder %s38, 0
      %p288 = por %p286, %p287
      %p289 = scmp.ne.s32.totalorder %s277, %s278
      %p290 = scmp.eq.s32.totalorder %s39, 3
      %p291 = por %p289, %p290
      %p293 = scmp.ne.s32.totalorder %s278, %s292
      %p294 = scmp.eq.s32.totalorder %s39, 0
      %p295 = por %p293, %p294
      %s297 = sadd.s32 %s296, 1
      %p300 = scmp.eq.s32.totalorder %s33, 3
      %p301 = scmp.ne.s32.totalorder %s296, %s298
      %p302 = scmp.eq.s32.totalorder %s33, 0
      %p303 = por %p301, %p302
      %p304 = scmp.ne.s32.totalorder %s296, %s298
      %p305 = scmp.eq.s32.totalorder %s38, 3
      %p306 = por %p304, %p305
      %p307 = scmp.ne.s32.totalorder %s298, %s299
      %p308 = scmp.eq.s32.totalorder %s38, 0
      %p309 = por %p307, %p308
      %p310 = scmp.ne.s32.totalorder %s298, %s299
      %p311 = scmp.eq.s32.totalorder %s39, 3
      %p312 = por %p310, %p311
      %p314 = scmp.ne.s32.totalorder %s299, %s313
      %p315 = scmp.eq.s32.totalorder %s39, 0
      %p316 = por %p314, %p315
      %s318 = sadd.s32 %s317, 1
      %p321 = scmp.eq.s32.totalorder %s33, 3
      %p322 = scmp.ne.s32.totalorder %s317, %s319
      %p323 = scmp.eq.s32.totalorder %s33, 0
      %p324 = por %p322, %p323
      %p325 = scmp.ne.s32.totalorder %s317, %s319
      %p326 = scmp.eq.s32.totalorder %s38, 3
      %p327 = por %p325, %p326
      %p328 = scmp.ne.s32.totalorder %s319, %s320
      %p329 = scmp.eq.s32.totalorder %s38, 0
      %p330 = por %p328, %p329
      %p331 = scmp.ne.s32.totalorder %s319, %s320
      %p332 = scmp.eq.s32.totalorder %s39, 3
      %p333 = por %p331, %p332
      %p335 = scmp.ne.s32.totalorder %s320, %s334
      %p336 = scmp.eq.s32.totalorder %s39, 0
      %p337 = por %p335, %p336
      %s339 = sadd.s32 %s338, 1
      %p342 = scmp.eq.s32.totalorder %s33, 3
      %p343 = scmp.ne.s32.totalorder %s338, %s340
      %p344 = scmp.eq.s32.totalorder %s33, 0
      %p345 = por %p343, %p344
      %p346 = scmp.ne.s32.totalorder %s338, %s340
      %p347 = scmp.eq.s32.totalorder %s38, 3
      %p348 = por %p346, %p347
      %p349 = scmp.ne.s32.totalorder %s340, %s341
      %p350 = scmp.eq.s32.totalorder %s38, 0
      %p351 = por %p349, %p350
      %p352 = scmp.ne.s32.totalorder %s340, %s341
      %p353 = scmp.eq.s32.totalorder %s39, 3
      %p354 = por %p352, %p353
      %p356 = scmp.ne.s32.totalorder %s341, %s355
      %p357 = scmp.eq.s32.totalorder %s39, 0
      %p358 = por %p356, %p357
      %s360 = sadd.s32 %s359, 1
      %p363 = scmp.eq.s32.totalorder %s33, 3
      %p364 = scmp.ne.s32.totalorder %s359, %s361
      %p365 = scmp.eq.s32.totalorder %s33, 0
      %p366 = por %p364, %p365
      %p367 = scmp.ne.s32.totalorder %s359, %s361
      %p368 = scmp.eq.s32.totalorder %s38, 3
      %p369 = por %p367, %p368
      %p370 = scmp.ne.s32.totalorder %s361, %s362
      %p371 = scmp.eq.s32.totalorder %s38, 0
      %p372 = por %p370, %p371
      %p373 = scmp.ne.s32.totalorder %s361, %s362
      %p374 = scmp.eq.s32.totalorder %s39, 3
      %p375 = por %p373, %p374
      %p377 = scmp.ne.s32.totalorder %s362, %s376
      %p378 = scmp.eq.s32.totalorder %s39, 0
      %p379 = por %p377, %p378
      %s380 = ssub.s32 %s40, %s52
      %s381 = ssub.s32 %s41, %s48
      %s382 = sor.u32 %s380, %s381
      %p383 = scmp.eq.s32.totalorder %s382, 0
      %s385 = sadd.s32 %s384, 1
      %s386 = scalar_select %p383, %s384, %s385
      %p389 = pneg %p383
      %p390 = scmp.eq.s32.totalorder %s33, 3
      %p391 = por %p389, %p390
      %p392 = scmp.ne.s32.totalorder %s384, %s387
      %p393 = scmp.eq.s32.totalorder %s33, 0
      %p394 = por %p392, %p393
      %p395 = scmp.ne.s32.totalorder %s384, %s387
      %p396 = scmp.eq.s32.totalorder %s38, 3
      %p397 = por %p395, %p396
      %p398 = scmp.ne.s32.totalorder %s387, %s388
      %p399 = scmp.eq.s32.totalorder %s38, 0
      %p400 = por %p398, %p399
      %p401 = scmp.ne.s32.totalorder %s387, %s388
      %p402 = scmp.eq.s32.totalorder %s39, 3
      %p403 = por %p401, %p402
      %p405 = scmp.ne.s32.totalorder %s388, %s404
      %p406 = scmp.eq.s32.totalorder %s39, 0
      %p407 = por %p405, %p406
      %s408 = ssub.s32 %s40, %s52
      %p409 = scmp.eq.s32.totalorder %s408, 0
      %s411 = sadd.s32 %s410, 1
      %s412 = scalar_select %p409, %s410, %s411
      %p415 = pneg %p409
      %p416 = scmp.eq.s32.totalorder %s33, 3
      %p417 = por %p415, %p416
      %p418 = scmp.ne.s32.totalorder %s410, %s413
      %p419 = scmp.eq.s32.totalorder %s33, 0
      %p420 = por %p418, %p419
      %p421 = scmp.ne.s32.totalorder %s410, %s413
      %p422 = scmp.eq.s32.totalorder %s38, 3
      %p423 = por %p421, %p422
      %p424 = scmp.ne.s32.totalorder %s413, %s414
      %p425 = scmp.eq.s32.totalorder %s38, 0
      %p426 = por %p424, %p425
      %p427 = scmp.ne.s32.totalorder %s413, %s414
      %p428 = scmp.eq.s32.totalorder %s39, 3
      %p429 = por %p427, %p428
      %p431 = scmp.ne.s32.totalorder %s414, %s430
      %p432 = scmp.eq.s32.totalorder %s39, 0
      %p433 = por %p431, %p432
      %p434 = scmp.le.s32.totalorder 1, %s33
      %p435 = scmp.lt.s32.totalorder %s33, 5
      %p436 = pnand %p434, %p435
      %p437 = pneg %p436
      // Predicated region
      $region9: #{tpu_custom_call.1} parent=5 // pred_check
        _
      $region10: #{tpu_custom_call.1} parent=5 // pred_check_branch
        %439 = sbr.rel (%p436) target = $region12
      $region11: #{tpu_custom_call.1} parent=5 // pred_region
        %s440 = ssub.s32 %s33, 1
        // Predicated region
        $region13: #{tpu_custom_call.1} parent=11 // pred_check
          %p441 = pneg %p120
        $region14: #{tpu_custom_call.1} parent=11 // pred_check_branch
          %443 = sbr.rel (%p441) target = $region16
        $region15: #{tpu_custom_call.1} parent=11 // pred_region
          _
        $region16: #{tpu_custom_call.1} parent=11 // pred_fallthru
          _
        // Predicated region
        $region17: #{tpu_custom_call.1} parent=11 // pred_check
          %p444 = pneg %p141
        $region18: #{tpu_custom_call.1} parent=11 // pred_check_branch
          %446 = sbr.rel (%p444) target = $region20
        $region19: #{tpu_custom_call.1} parent=11 // pred_region
          %s448 = ssub.s32 64, 64
          %449 = vsyncadd [#allocation7], %s448
          %s451 = sshll.u32 [#allocation6], 4
          %s452 = int_to_ptr.vmem [resolvable:$true] %s451
          %454 = dma.hbm_to_vmem [thread:$0]  %s3, 64, %s452, [#allocation7]
        $region20: #{tpu_custom_call.1} parent=11 // pred_fallthru
          _
        // Predicated region
        $region21: #{tpu_custom_call.1} parent=11 // pred_check
          %p455 = pneg %p162
        $region22: #{tpu_custom_call.1} parent=11 // pred_check_branch
          %457 = sbr.rel (%p455) target = $region24
        $region23: #{tpu_custom_call.1} parent=11 // pred_region
          %s459 = ssub.s32 64, 64
          %460 = vsyncadd [#allocation7], %s459
          %s462 = sshll.u32 [#allocation8], 4
          %s463 = int_to_ptr.vmem [resolvable:$true] %s462
          %465 = dma.hbm_to_vmem [thread:$0]  %s4, 64, %s463, [#allocation7]
        $region24: #{tpu_custom_call.1} parent=11 // pred_fallthru
          _
        // Predicated region
        $region25: #{tpu_custom_call.1} parent=11 // pred_check
          %p466 = pneg %p183
        $region26: #{tpu_custom_call.1} parent=11 // pred_check_branch
          %468 = sbr.rel (%p466) target = $region28
        $region27: #{tpu_custom_call.1} parent=11 // pred_region
          _
        $region28: #{tpu_custom_call.1} parent=11 // pred_fallthru
          _
        // Predicated region
        $region29: #{tpu_custom_call.1} parent=11 // pred_check
          %p469 = pneg %p204
        $region30: #{tpu_custom_call.1} parent=11 // pred_check_branch
          %471 = sbr.rel (%p469) target = $region32
        $region31: #{tpu_custom_call.1} parent=11 // pred_region
          _
        $region32: #{tpu_custom_call.1} parent=11 // pred_fallthru
          _
        // Predicated region
        $region33: #{tpu_custom_call.1} parent=11 // pred_check
          %p472 = pneg %p225
        $region34: #{tpu_custom_call.1} parent=11 // pred_check_branch
          %474 = sbr.rel (%p472) target = $region36
        $region35: #{tpu_custom_call.1} parent=11 // pred_region
          _
        $region36: #{tpu_custom_call.1} parent=11 // pred_fallthru
          _
        // Predicated region
        $region37: #{tpu_custom_call.1} parent=11 // pred_check
          %p475 = pneg %p246
        $region38: #{tpu_custom_call.1} parent=11 // pred_check_branch
          %477 = sbr.rel (%p475) target = $region40
        $region39: #{tpu_custom_call.1} parent=11 // pred_region
          _
        $region40: #{tpu_custom_call.1} parent=11 // pred_fallthru
          _
        // Predicated region
        $region41: #{tpu_custom_call.1} parent=11 // pred_check
          %p478 = pneg %p267
        $region42: #{tpu_custom_call.1} parent=11 // pred_check_branch
          %480 = sbr.rel (%p478) target = $region44
        $region43: #{tpu_custom_call.1} parent=11 // pred_region
          _
        $region44: #{tpu_custom_call.1} parent=11 // pred_fallthru
          _
        // Predicated region
        $region45: #{tpu_custom_call.1} parent=11 // pred_check
          %p481 = pneg %p288
        $region46: #{tpu_custom_call.1} parent=11 // pred_check_branch
          %483 = sbr.rel (%p481) target = $region48
        $region47: #{tpu_custom_call.1} parent=11 // pred_region
          _
        $region48: #{tpu_custom_call.1} parent=11 // pred_fallthru
          _
        // Predicated region
        $region49: #{tpu_custom_call.1} parent=11 // pred_check
          %p484 = pneg %p309
        $region50: #{tpu_custom_call.1} parent=11 // pred_check_branch
          %486 = sbr.rel (%p484) target = $region52
        $region51: #{tpu_custom_call.1} parent=11 // pred_region
          _
        $region52: #{tpu_custom_call.1} parent=11 // pred_fallthru
          _
        // Predicated region
        $region53: #{tpu_custom_call.1} parent=11 // pred_check
          %p487 = pneg %p330
        $region54: #{tpu_custom_call.1} parent=11 // pred_check_branch
          %489 = sbr.rel (%p487) target = $region56
        $region55: #{tpu_custom_call.1} parent=11 // pred_region
          _
        $region56: #{tpu_custom_call.1} parent=11 // pred_fallthru
          _
        // Predicated region
        $region57: #{tpu_custom_call.1} parent=11 // pred_check
          %p490 = pneg %p351
        $region58: #{tpu_custom_call.1} parent=11 // pred_check_branch
          %492 = sbr.rel (%p490) target = $region60
        $region59: #{tpu_custom_call.1} parent=11 // pred_region
          _
        $region60: #{tpu_custom_call.1} parent=11 // pred_fallthru
          _
        // Predicated region
        $region61: #{tpu_custom_call.1} parent=11 // pred_check
          %p493 = pneg %p372
        $region62: #{tpu_custom_call.1} parent=11 // pred_check_branch
          %495 = sbr.rel (%p493) target = $region64
        $region63: #{tpu_custom_call.1} parent=11 // pred_region
          _
        $region64: #{tpu_custom_call.1} parent=11 // pred_fallthru
          _
      $region12: #{tpu_custom_call.1} parent=5 // pred_fallthru
        _
      %p496 = scmp.lt.s32.totalorder %s33, 4
      // Predicated region
      $region65: #{tpu_custom_call.1} parent=5 // pred_check
        %p497 = pneg %p496
      $region66: #{tpu_custom_call.1} parent=5 // pred_check_branch
        %499 = sbr.rel (%p497) target = $region68
      $region67: #{tpu_custom_call.1} parent=5 // pred_region
        // Predicated region
        $region69: #{tpu_custom_call.1} parent=67 // pred_check
          %p500 = pneg %p67
        $region70: #{tpu_custom_call.1} parent=67 // pred_check_branch
          %502 = sbr.rel (%p500) target = $region72
        $region71: #{tpu_custom_call.1} parent=67 // pred_region
          %p503 = scmp.lt.s32.totalorder %s40, 1
          %s504 = scalar_select %p503, %s40, 1
          %p505 = scmp.lt.s32.totalorder %s41, 1
          %s506 = scalar_select %p505, %s41, 1
          %s507 = smul.addr %s504, 2
          %s508 = sadd.s32 %s506, %s507
          %s509 = smul.addr %s508, 4
          %s510 = scalar_lea.vmem %s0, %s509
        $region72: #{tpu_custom_call.1} parent=67 // pred_fallthru
          _
        // Predicated region
        $region73: #{tpu_custom_call.1} parent=67 // pred_check
          %p511 = pneg %p93
        $region74: #{tpu_custom_call.1} parent=67 // pred_check_branch
          %513 = sbr.rel (%p511) target = $region76
        $region75: #{tpu_custom_call.1} parent=67 // pred_region
          %s514 = sand.u32 %s83, 1
          %s515 = scalar_lea.sflag [#allocation4], %s514
          %s516 = sand.u32 %s83, 1
          %s517 = scalar_lea.vmem [#allocation3], %s516
          %s519 = ssub.s32 16, 16
          %520 = vsyncadd %s515, %s519
          %s521 = smul.addr %s40, 16
          %s522 = scalar_lea.hbm %s1, %s521
          %s524 = sshll.u32 %s517, 4
          %s525 = int_to_ptr.vmem [resolvable:$true] %s524
          %527 = dma.hbm_to_vmem [thread:$0]  %s522, 16, %s525, %s515
        $region76: #{tpu_custom_call.1} parent=67 // pred_fallthru
          _
      $region68: #{tpu_custom_call.1} parent=5 // pred_fallthru
        _
      %p528 = scmp.le.s32.totalorder 1, %s33
      %p529 = scmp.lt.s32.totalorder %s33, 5
      %p530 = pnand %p528, %p529
      %p531 = pneg %p530
      // Predicated region
      $region77: #{tpu_custom_call.1} parent=5 // pred_check
        _
      $region78: #{tpu_custom_call.1} parent=5 // pred_check_branch
        %533 = sbr.rel (%p530) target = $region80
      $region79: #{tpu_custom_call.1} parent=5 // pred_region
        %s534 = ssub.s32 %s33, 1
        %s535 = sand.u32 %s86, 1
        %s536 = scalar_lea.sflag [#allocation4], %s535
        %s537 = sand.u32 %s86, 1
        %s538 = scalar_lea.vmem [#allocation3], %s537
        // Predicated region
        $region81: #{tpu_custom_call.1} parent=79 // pred_check
          %p539 = pneg %p99
        $region82: #{tpu_custom_call.1} parent=79 // pred_check_branch
          %541 = sbr.rel (%p539) target = $region84
        $region83: #{tpu_custom_call.1} parent=79 // pred_region
          %542 = dma.done %s536, 16
        $region84: #{tpu_custom_call.1} parent=79 // pred_fallthru
          _
        // Predicated region
        $region85: #{tpu_custom_call.1} parent=79 // pred_check
          %p543 = pneg %p141
        $region86: #{tpu_custom_call.1} parent=79 // pred_check_branch
          %545 = sbr.rel (%p543) target = $region88
        $region87: #{tpu_custom_call.1} parent=79 // pred_region
          %546 = dma.done [#allocation7], 64
        $region88: #{tpu_custom_call.1} parent=79 // pred_fallthru
          _
        // Predicated region
        $region89: #{tpu_custom_call.1} parent=79 // pred_check
          %p547 = pneg %p162
        $region90: #{tpu_custom_call.1} parent=79 // pred_check_branch
          %549 = sbr.rel (%p547) target = $region92
        $region91: #{tpu_custom_call.1} parent=79 // pred_region
          %550 = dma.done [#allocation7], 64
        $region92: #{tpu_custom_call.1} parent=79 // pred_fallthru
          _
        %p551 = scmp.lt.s32.totalorder %s42, 1
        %s552 = scalar_select %p551, %s42, 1
        %p553 = scmp.lt.s32.totalorder %s43, 1
        %s554 = scalar_select %p553, %s43, 1
        %s555 = smul.addr %s552, 2
        %s556 = sadd.s32 %s554, %s555
        %s557 = smul.addr %s556, 4
        %s558 = scalar_lea.vmem %s0, %s557
        %p559 = pneg %p73
        %p560 = pneg %p70
        %s561 = sand.u32 %s86, 1
        %s562 = scalar_lea.sflag [#allocation4], %s561
        %s563 = sand.u32 %s86, 1
        %s564 = scalar_lea.vmem [#allocation3], %s563
        %p565 = pneg %p99
        %p566 = pneg %p96
        %p567 = pneg %p120
        %p568 = pneg %p117
        %p569 = pneg %p141
        %p570 = pneg %p138
        %p571 = pneg %p162
        %p572 = pneg %p159
        %p573 = pneg %p183
        %p574 = pneg %p180
        %p575 = pneg %p204
        %p576 = pneg %p201
        %p577 = pneg %p225
        %p578 = pneg %p222
        %p579 = pneg %p246
        %p580 = pneg %p243
        %p581 = pneg %p267
        %p582 = pneg %p264
        %p583 = pneg %p288
        %p584 = pneg %p285
        %p585 = pneg %p309
        %p586 = pneg %p306
        %p587 = pneg %p330
        %p588 = pneg %p327
        %p589 = pneg %p351
        %p590 = pneg %p348
        %p591 = pneg %p372
        %p592 = pneg %p369
        %p593 = pneg %p400
        %p594 = pneg %p397
        %s595 = sand.u32 %s387, 1
        %s596 = scalar_lea.sflag [#allocation5], %s595
        %s597 = sand.u32 %s387, 1
        %s598 = smul.addr %s597, 8
        %s599 = scalar_lea.vmem [#allocation9], %s598
        %p600 = pneg %p426
        %p601 = pneg %p423
        %s602 = sand.u32 %s413, 1
        %s603 = scalar_lea.sflag [#allocation11], %s602
        %s604 = sand.u32 %s413, 1
        %s605 = scalar_lea.vmem [#allocation10], %s604
        %p606 = scmp.lt.s32.totalorder %s42, 1
        %s607 = scalar_select %p606, %s42, 1
        %p608 = scmp.lt.s32.totalorder %s43, 1
        %s609 = scalar_select %p608, %s43, 1
        %s610 = smul.addr %s607, 2
        %s611 = sadd.s32 %s609, %s610
        %s612 = smul.addr %s611, 4
        %s613 = scalar_lea.vmem %s0, %s612
        %v615 = vld [vmem:[%s613] sm:$0xf]
        %p616 = scmp.eq.s32.totalorder %s43, 0
        // Predicated region
        $region93: #{tpu_custom_call.1} parent=79 // pred_check
          %p617 = pneg %p616
        $region94: #{tpu_custom_call.1} parent=79 // pred_check_branch
          %619 = sbr.rel (%p617) target = $region96
        $region95: #{tpu_custom_call.1} parent=79 // pred_region
          %v620 = vld [vmem:[%s538] sm:$0x1]
          %vm621 = vcmask 253952
          %622 = vst.msk [vmem:[#allocation2] sm:$0x1] %vm621, %v620
        $region96: #{tpu_custom_call.1} parent=79 // pred_fallthru
          _
        %v623 = vld [vmem:[%s6] sm:$0xf]
        %v624 = vld [vmem:[%s6 + $0x4] sm:$0xf]
        %v625 = vld [vmem:[%s6 + $0x8] sm:$0xf]
        %v626 = vld [vmem:[%s6 + $0xc] sm:$0xf]
        %v627 = vld [vmem:[%s7] sm:$0x1]
        %v629 = vlaneseq
        %v630 = vshrl.u32 %v629, 7
        %v631 = vsub.s32 0, %v630
        %v632 = vrot.slane %v627, %v631
        %v638 = vunpack.c.l.b16 %v623
        %v639 = vunpack.c.l.b16 %v624
        %v640 = vunpack.c.l.b16 %v625
        %v641 = vunpack.c.l.b16 %v626
        %v642 = vpack.c.b16 %v639, %v638
        %v643 = vpack.c.b16 %v641, %v640
        %vm646 = vcmask 261120
        %v648 = vsel %vm646, %v615, 0
        %650 = vmatprep.subr.bf16.mxu0 0
        %651 = vmatpush1.bf16.msra.mxu0 0
        %652 = vmatprep.subr.bf16.mxu0 0
        %653 = vmatpush1.bf16.msra.mxu0 0
        %654 = vmatprep.subr.bf16.mxu0 0
        %655 = vmatpush1.bf16.msra.mxu0 0
        %656 = vmatprep.subr.bf16.mxu0 0
        %657 = vmatpush1.bf16.msra.mxu0 0
        %658 = vmatprep.subr.bf16.mxu0 0
        %659 = vmatpush1.bf16.msra.mxu0 0
        %660 = vmatprep.subr.bf16.mxu0 0
        %661 = vmatpush1.bf16.msra.mxu0 0
        %662 = vmatprep.subr.bf16.mxu0 0
        %663 = vmatpush1.bf16.msra.mxu0 %v643
        %664 = vmatprep.subr.bf16.mxu0 0
        %665 = vmatpush1.bf16.msra.mxu0 %v642
        %666 = vmatprep.subr.bf16.mxu0 0
        %667 = vmatpush2.bf16.msra.mxu0 0
        %668 = vmatprep.subr.bf16.mxu0 0
        %669 = vmatpush2.bf16.msra.mxu0 0
        %670 = vmatprep.subr.bf16.mxu0 0
        %671 = vmatpush2.bf16.msra.mxu0 0
        %672 = vmatprep.subr.bf16.mxu0 0
        %673 = vmatpush2.bf16.msra.mxu0 0
        %674 = vmatprep.subr.bf16.mxu0 0
        %675 = vmatpush2.bf16.msra.mxu0 0
        %676 = vmatprep.subr.bf16.mxu0 0
        %677 = vmatpush2.bf16.msra.mxu0 0
        %678 = vmatprep.subr.bf16.mxu0 0
        %679 = vmatpush2.bf16.msra.mxu0 0
        %680 = vmatprep.subr.bf16.mxu0 0
        %681 = vmatpush2.bf16.msra.mxu0 0
        %682 = vmatprep.mubr.bf16.mxu0 0
        %683 = vmatmul.mubr.bf16.gmra.mxu0 %v648
        %v684 = vpop.f32.mrf.mxu0
        %v685 = vadd.f32 %v632, %v684
        %v686 = vpop.f32.mrf.mxu0
        %v687 = vpop.f32.mrf.mxu0
        %v688 = vpop.f32.mrf.mxu0
        %689 = vdwg.mxu0
        %v690 = vsub.f32 0.0, %v685
        %v691 = vmul.f32 %v690, 1.442695
        %v692 = vpow.pop %v691
        %v693 = vadd.f32 %v692, 1.0
        %v694 = vrcp.pop %v693
        %v695 = vmul.f32 %v685, %v694
        %697 = vrot.lane.b32.xlu0 %v695, 96
        %v698 = vpop.permute.xlu0 %697
        %v700 = vmul.f32 %v685, %v698
        %v701 = vld [vmem:[%s10] sm:$0xf]
        %v702 = vld [vmem:[%s10 + $0x4] sm:$0xf]
        %v703 = vld [vmem:[%s10 + $0x8] sm:$0xf]
        %v704 = vld [vmem:[%s10 + $0xc] sm:$0xf]
        %v705 = vld [vmem:[%s11] sm:$0x1]
        %v707 = vlaneseq
        %v708 = vshrl.u32 %v707, 7
        %v709 = vsub.s32 0, %v708
        %v710 = vrot.slane %v705, %v709
        %v716 = vunpack.c.l.b16 %v701
        %v717 = vunpack.c.l.b16 %v702
        %v718 = vunpack.c.l.b16 %v703
        %v719 = vunpack.c.l.b16 %v704
        %v720 = vpack.c.b16 %v717, %v716
        %v721 = vpack.c.b16 %v719, %v718
        %724 = vmatprep.subr.bf16.mxu0 0
        %725 = vmatpush1.bf16.msra.mxu0 0
        %726 = vmatprep.subr.bf16.mxu0 0
        %727 = vmatpush1.bf16.msra.mxu0 0
        %728 = vmatprep.subr.bf16.mxu0 0
        %729 = vmatpush1.bf16.msra.mxu0 0
        %730 = vmatprep.subr.bf16.mxu0 0
        %731 = vmatpush1.bf16.msra.mxu0 0
        %732 = vmatprep.subr.bf16.mxu0 0
        %733 = vmatpush1.bf16.msra.mxu0 0
        %734 = vmatprep.subr.bf16.mxu0 0
        %735 = vmatpush1.bf16.msra.mxu0 0
        %736 = vmatprep.subr.bf16.mxu0 0
        %737 = vmatpush1.bf16.msra.mxu0 %v721
        %738 = vmatprep.subr.bf16.mxu0 0
        %739 = vmatpush1.bf16.msra.mxu0 %v720
        %740 = vmatprep.subr.bf16.mxu0 0
        %741 = vmatpush2.bf16.msra.mxu0 0
        %742 = vmatprep.subr.bf16.mxu0 0
        %743 = vmatpush2.bf16.msra.mxu0 0
        %744 = vmatprep.subr.bf16.mxu0 0
        %745 = vmatpush2.bf16.msra.mxu0 0
        %746 = vmatprep.subr.bf16.mxu0 0
        %747 = vmatpush2.bf16.msra.mxu0 0
        %748 = vmatprep.subr.bf16.mxu0 0
        %749 = vmatpush2.bf16.msra.mxu0 0
        %750 = vmatprep.subr.bf16.mxu0 0
        %751 = vmatpush2.bf16.msra.mxu0 0
        %752 = vmatprep.subr.bf16.mxu0 0
        %753 = vmatpush2.bf16.msra.mxu0 0
        %754 = vmatprep.subr.bf16.mxu0 0
        %755 = vmatpush2.bf16.msra.mxu0 0
        %756 = vmatprep.mubr.bf16.mxu0 0
        %757 = vmatmul.mubr.bf16.gmra.mxu0 %v648
        %v758 = vpop.f32.mrf.mxu0
        %v759 = vadd.f32 %v710, %v758
        %v760 = vpop.f32.mrf.mxu0
        %v761 = vpop.f32.mrf.mxu0
        %v762 = vpop.f32.mrf.mxu0
        %763 = vdwg.mxu0
        %v764 = vld [vmem:[%s12] sm:$0x1]
        %v765 = vmax.f32 %v759, 0.0
        %vm766 = vcmp.ne.f32.partialorder %v759, %v759
        %v767 = vadd.f32 %v759, 0.0
        %v768 = vand.u32 2147483647, %v759
        %v769 = vsub.f32 0.0, %v768
        %v770 = vmul.f32 %v769, 1.442695
        %v771 = vpow.pop %v770
        %v772 = vadd.f32 %v771, 1.0
        %v773 = vlog2.pop %v772
        %v774 = vmul.f32 %v773, 0.6931472
        %v775 = vmul.f32 -0.5, %v771
        %v776 = vadd.f32 %v775, 1.0
        %v777 = vmul.f32 %v776, %v771
        %v778 = vand.u32 2147483647, %v771
        %vm779 = vcmp.lt.f32.partialorder %v778, 0.0004427343
        %v780 = vsel %vm779, %v777, %v774
        %v781 = vadd.f32 %v765, %v780
        %v782 = vsel %vm766, %v767, %v781
        %v784 = vlaneseq
        %v785 = vshrl.u32 %v784, 7
        %v786 = vsub.s32 0, %v785
        %v787 = vrot.slane %v764, %v786
        %v789 = vmul.f32 %v787, %v782
        %v790 = vld [vmem:[%s2] sm:$0xff]
        %vm791 = vcmask 64512
        %v793 = vsel %vm791, %v790, 0
        %795 = vmatprep.subr.mxu0 0.0
        %796 = vmatpush1.msra.mxu0 0.0
        %797 = vmatprep.subr.mxu0 0.0
        %798 = vmatpush1.msra.mxu0 0.0
        %799 = vmatprep.subr.mxu0 0.0
        %800 = vmatpush1.msra.mxu0 0.0
        %801 = vmatprep.subr.mxu0 0.0
        %802 = vmatpush1.msra.mxu0 0.0
        %803 = vmatprep.subr.mxu0 0.0
        %804 = vmatpush1.msra.mxu0 0.0
        %805 = vmatprep.subr.mxu0 0.0
        %806 = vmatpush1.msra.mxu0 0.0
        %807 = vmatprep.subr.mxu0 0.0
        %808 = vmatpush1.msra.mxu0 0.0
        %809 = vmatprep.subr.mxu0 0.0
        %810 = vmatpush1.msra.mxu0 0.0
        %811 = vmatprep.subr.mxu0 0.0
        %812 = vmatpush1.msra.mxu0 0.0
        %813 = vmatprep.subr.mxu0 0.0
        %814 = vmatpush1.msra.mxu0 0.0
        %815 = vmatprep.subr.mxu0 0.0
        %816 = vmatpush1.msra.mxu0 0.0
        %817 = vmatprep.subr.mxu0 0.0
        %818 = vmatpush1.msra.mxu0 0.0
        %819 = vmatprep.subr.mxu0 0.0
        %820 = vmatpush1.msra.mxu0 0.0
        %821 = vmatprep.subr.mxu0 0.0
        %822 = vmatpush1.msra.mxu0 0.0
        %823 = vmatprep.subr.mxu0 0.0
        %824 = vmatpush1.msra.mxu0 0.0
        %825 = vmatprep.subr.mxu0 0.0
        %826 = vmatpush1.msra.mxu0 %v789
        %827 = vmatprep.subr.mxu0 0.0
        %828 = vmatpush2.msra.mxu0 0.0
        %829 = vmatprep.subr.mxu0 0.0
        %830 = vmatpush2.msra.mxu0 0.0
        %831 = vmatprep.subr.mxu0 0.0
        %832 = vmatpush2.msra.mxu0 0.0
        %833 = vmatprep.subr.mxu0 0.0
        %834 = vmatpush2.msra.mxu0 0.0
        %835 = vmatprep.subr.mxu0 0.0
        %836 = vmatpush2.msra.mxu0 0.0
        %837 = vmatprep.subr.mxu0 0.0
        %838 = vmatpush2.msra.mxu0 0.0
        %839 = vmatprep.subr.mxu0 0.0
        %840 = vmatpush2.msra.mxu0 0.0
        %841 = vmatprep.subr.mxu0 0.0
        %842 = vmatpush2.msra.mxu0 0.0
        %843 = vmatprep.subr.mxu0 0.0
        %844 = vmatpush2.msra.mxu0 0.0
        %845 = vmatprep.subr.mxu0 0.0
        %846 = vmatpush2.msra.mxu0 0.0
        %847 = vmatprep.subr.mxu0 0.0
        %848 = vmatpush2.msra.mxu0 0.0
        %849 = vmatprep.subr.mxu0 0.0
        %850 = vmatpush2.msra.mxu0 0.0
        %851 = vmatprep.subr.mxu0 0.0
        %852 = vmatpush2.msra.mxu0 0.0
        %853 = vmatprep.subr.mxu0 0.0
        %854 = vmatpush2.msra.mxu0 0.0
        %855 = vmatprep.subr.mxu0 0.0
        %856 = vmatpush2.msra.mxu0 0.0
        %857 = vmatprep.subr.mxu0 0.0
        %858 = vmatpush2.msra.mxu0 0.0
        %859 = vmatprep.mubr.f32.mxu0 0.0
        %860 = vmatmul.mubr.f32.gmra.mxu0 %v793
        %v861 = vpop.f32.mrf.mxu0
        %v862 = vadd.f32 0.0, %v861
        %v863 = vpop.f32.mrf.mxu0
        %864 = vdwg.mxu0
        %v865 = vlaneseq
        %v866 = vshrl.u32 %v865, 7
        %v867 = vsub.s32 4, %v866
        %v868 = vrot.slane %v862, %v867
        %v869 = vsub.f32 %v862, %v868
        %v870 = vmax.f32 %v869, -80.0
        %v871 = vmin.f32 %v870, 80.0
        %v872 = vmul.f32 %v871, 1.442695
        %v873 = vpow.pop %v872
        %v874 = vsub.f32 %v868, %v862
        %v875 = vmax.f32 %v874, -80.0
        %v876 = vmin.f32 %v875, 80.0
        %v877 = vmul.f32 %v876, 1.442695
        %v878 = vpow.pop %v877
        %v879 = vmul.f32 %v862, 1.442695
        %v880 = vpow.pop %v879
        %v881 = vld [vmem:[#allocation8] sm:$0xf]
        %vm882 = vcmask 31744
        %v884 = vsel %vm882, %v873, 0
        %vm886 = vcmask 1043456
        %v888 = vsel %vm886, %v881, 0
        %890 = vmatprep.subr.mxu0 0.0
        %891 = vmatpush1.msra.mxu0 0.0
        %892 = vmatprep.subr.mxu0 0.0
        %893 = vmatpush1.msra.mxu0 0.0
        %894 = vmatprep.subr.mxu0 0.0
        %895 = vmatpush1.msra.mxu0 0.0
        %896 = vmatprep.subr.mxu0 0.0
        %897 = vmatpush1.msra.mxu0 0.0
        %898 = vmatprep.subr.mxu0 0.0
        %899 = vmatpush1.msra.mxu0 0.0
        %900 = vmatprep.subr.mxu0 0.0
        %901 = vmatpush1.msra.mxu0 0.0
        %902 = vmatprep.subr.mxu0 0.0
        %903 = vmatpush1.msra.mxu0 0.0
        %904 = vmatprep.subr.mxu0 0.0
        %905 = vmatpush1.msra.mxu0 0.0
        %906 = vmatprep.subr.mxu0 0.0
        %907 = vmatpush1.msra.mxu0 0.0
        %908 = vmatprep.subr.mxu0 0.0
        %909 = vmatpush1.msra.mxu0 0.0
        %910 = vmatprep.subr.mxu0 0.0
        %911 = vmatpush1.msra.mxu0 0.0
        %912 = vmatprep.subr.mxu0 0.0
        %913 = vmatpush1.msra.mxu0 0.0
        %914 = vmatprep.subr.mxu0 0.0
        %915 = vmatpush1.msra.mxu0 0.0
        %916 = vmatprep.subr.mxu0 0.0
        %917 = vmatpush1.msra.mxu0 0.0
        %918 = vmatprep.subr.mxu0 0.0
        %919 = vmatpush1.msra.mxu0 0.0
        %920 = vmatprep.subr.mxu0 0.0
        %921 = vmatpush1.msra.mxu0 %v888
        %922 = vmatprep.subr.mxu0 0.0
        %923 = vmatpush2.msra.mxu0 0.0
        %924 = vmatprep.subr.mxu0 0.0
        %925 = vmatpush2.msra.mxu0 0.0
        %926 = vmatprep.subr.mxu0 0.0
        %927 = vmatpush2.msra.mxu0 0.0
        %928 = vmatprep.subr.mxu0 0.0
        %929 = vmatpush2.msra.mxu0 0.0
        %930 = vmatprep.subr.mxu0 0.0
        %931 = vmatpush2.msra.mxu0 0.0
        %932 = vmatprep.subr.mxu0 0.0
        %933 = vmatpush2.msra.mxu0 0.0
        %934 = vmatprep.subr.mxu0 0.0
        %935 = vmatpush2.msra.mxu0 0.0
        %936 = vmatprep.subr.mxu0 0.0
        %937 = vmatpush2.msra.mxu0 0.0
        %938 = vmatprep.subr.mxu0 0.0
        %939 = vmatpush2.msra.mxu0 0.0
        %940 = vmatprep.subr.mxu0 0.0
        %941 = vmatpush2.msra.mxu0 0.0
        %942 = vmatprep.subr.mxu0 0.0
        %943 = vmatpush2.msra.mxu0 0.0
        %944 = vmatprep.subr.mxu0 0.0
        %945 = vmatpush2.msra.mxu0 0.0
        %946 = vmatprep.subr.mxu0 0.0
        %947 = vmatpush2.msra.mxu0 0.0
        %948 = vmatprep.subr.mxu0 0.0
        %949 = vmatpush2.msra.mxu0 0.0
        %950 = vmatprep.subr.mxu0 0.0
        %951 = vmatpush2.msra.mxu0 0.0
        %952 = vmatprep.subr.mxu0 0.0
        %953 = vmatpush2.msra.mxu0 0.0
        %954 = vmatprep.mubr.f32.mxu0 0.0
        %955 = vmatmul.mubr.f32.gmra.mxu0 %v884
        %v956 = vpop.f32.mrf.mxu0
        %v957 = vadd.f32 0.0, %v956
        %v958 = vpop.f32.mrf.mxu0
        %959 = vdwg.mxu0
        %v961 = vsel %vm882, %v878, 0
        %963 = vmatprep.subr.mxu0 0.0
        %964 = vmatpush1.msra.mxu0 0.0
        %965 = vmatprep.subr.mxu0 0.0
        %966 = vmatpush1.msra.mxu0 0.0
        %967 = vmatprep.subr.mxu0 0.0
        %968 = vmatpush1.msra.mxu0 0.0
        %969 = vmatprep.subr.mxu0 0.0
        %970 = vmatpush1.msra.mxu0 0.0
        %971 = vmatprep.subr.mxu0 0.0
        %972 = vmatpush1.msra.mxu0 0.0
        %973 = vmatprep.subr.mxu0 0.0
        %974 = vmatpush1.msra.mxu0 0.0
        %975 = vmatprep.subr.mxu0 0.0
        %976 = vmatpush1.msra.mxu0 0.0
        %977 = vmatprep.subr.mxu0 0.0
        %978 = vmatpush1.msra.mxu0 0.0
        %979 = vmatprep.subr.mxu0 0.0
        %980 = vmatpush1.msra.mxu0 0.0
        %981 = vmatprep.subr.mxu0 0.0
        %982 = vmatpush1.msra.mxu0 0.0
        %983 = vmatprep.subr.mxu0 0.0
        %984 = vmatpush1.msra.mxu0 0.0
        %985 = vmatprep.subr.mxu0 0.0
        %986 = vmatpush1.msra.mxu0 0.0
        %987 = vmatprep.subr.mxu0 0.0
        %988 = vmatpush1.msra.mxu0 0.0
        %989 = vmatprep.subr.mxu0 0.0
        %990 = vmatpush1.msra.mxu0 0.0
        %991 = vmatprep.subr.mxu0 0.0
        %992 = vmatpush1.msra.mxu0 0.0
        %993 = vmatprep.subr.mxu0 0.0
        %994 = vmatpush1.msra.mxu0 %v888
        %995 = vmatprep.subr.mxu0 0.0
        %996 = vmatpush2.msra.mxu0 0.0
        %997 = vmatprep.subr.mxu0 0.0
        %998 = vmatpush2.msra.mxu0 0.0
        %999 = vmatprep.subr.mxu0 0.0
        %1000 = vmatpush2.msra.mxu0 0.0
        %1001 = vmatprep.subr.mxu0 0.0
        %1002 = vmatpush2.msra.mxu0 0.0
        %1003 = vmatprep.subr.mxu0 0.0
        %1004 = vmatpush2.msra.mxu0 0.0
        %1005 = vmatprep.subr.mxu0 0.0
        %1006 = vmatpush2.msra.mxu0 0.0
        %1007 = vmatprep.subr.mxu0 0.0
        %1008 = vmatpush2.msra.mxu0 0.0
        %1009 = vmatprep.subr.mxu0 0.0
        %1010 = vmatpush2.msra.mxu0 0.0
        %1011 = vmatprep.subr.mxu0 0.0
        %1012 = vmatpush2.msra.mxu0 0.0
        %1013 = vmatprep.subr.mxu0 0.0
        %1014 = vmatpush2.msra.mxu0 0.0
        %1015 = vmatprep.subr.mxu0 0.0
        %1016 = vmatpush2.msra.mxu0 0.0
        %1017 = vmatprep.subr.mxu0 0.0
        %1018 = vmatpush2.msra.mxu0 0.0
        %1019 = vmatprep.subr.mxu0 0.0
        %1020 = vmatpush2.msra.mxu0 0.0
        %1021 = vmatprep.subr.mxu0 0.0
        %1022 = vmatpush2.msra.mxu0 0.0
        %1023 = vmatprep.subr.mxu0 0.0
        %1024 = vmatpush2.msra.mxu0 0.0
        %1025 = vmatprep.subr.mxu0 0.0
        %1026 = vmatpush2.msra.mxu0 0.0
        %1027 = vmatprep.mubr.f32.mxu0 0.0
        %1028 = vmatmul.mubr.f32.gmra.mxu0 %v961
        %v1029 = vpop.f32.mrf.mxu0
        %v1030 = vadd.f32 0.0, %v1029
        %v1031 = vpop.f32.mrf.mxu0
        %1032 = vdwg.mxu0
        %v1034 = vsel %vm882, %v880, 0
        %1036 = vmatprep.subr.mxu0 0.0
        %1037 = vmatpush1.msra.mxu0 0.0
        %1038 = vmatprep.subr.mxu0 0.0
        %1039 = vmatpush1.msra.mxu0 0.0
        %1040 = vmatprep.subr.mxu0 0.0
        %1041 = vmatpush1.msra.mxu0 0.0
        %1042 = vmatprep.subr.mxu0 0.0
        %1043 = vmatpush1.msra.mxu0 0.0
        %1044 = vmatprep.subr.mxu0 0.0
        %1045 = vmatpush1.msra.mxu0 0.0
        %1046 = vmatprep.subr.mxu0 0.0
        %1047 = vmatpush1.msra.mxu0 0.0
        %1048 = vmatprep.subr.mxu0 0.0
        %1049 = vmatpush1.msra.mxu0 0.0
        %1050 = vmatprep.subr.mxu0 0.0
        %1051 = vmatpush1.msra.mxu0 0.0
        %1052 = vmatprep.subr.mxu0 0.0
        %1053 = vmatpush1.msra.mxu0 0.0
        %1054 = vmatprep.subr.mxu0 0.0
        %1055 = vmatpush1.msra.mxu0 0.0
        %1056 = vmatprep.subr.mxu0 0.0
        %1057 = vmatpush1.msra.mxu0 0.0
        %1058 = vmatprep.subr.mxu0 0.0
        %1059 = vmatpush1.msra.mxu0 0.0
        %1060 = vmatprep.subr.mxu0 0.0
        %1061 = vmatpush1.msra.mxu0 0.0
        %1062 = vmatprep.subr.mxu0 0.0
        %1063 = vmatpush1.msra.mxu0 0.0
        %1064 = vmatprep.subr.mxu0 0.0
        %1065 = vmatpush1.msra.mxu0 0.0
        %1066 = vmatprep.subr.mxu0 0.0
        %1067 = vmatpush1.msra.mxu0 %v888
        %1068 = vmatprep.subr.mxu0 0.0
        %1069 = vmatpush2.msra.mxu0 0.0
        %1070 = vmatprep.subr.mxu0 0.0
        %1071 = vmatpush2.msra.mxu0 0.0
        %1072 = vmatprep.subr.mxu0 0.0
        %1073 = vmatpush2.msra.mxu0 0.0
        %1074 = vmatprep.subr.mxu0 0.0
        %1075 = vmatpush2.msra.mxu0 0.0
        %1076 = vmatprep.subr.mxu0 0.0
        %1077 = vmatpush2.msra.mxu0 0.0
        %1078 = vmatprep.subr.mxu0 0.0
        %1079 = vmatpush2.msra.mxu0 0.0
        %1080 = vmatprep.subr.mxu0 0.0
        %1081 = vmatpush2.msra.mxu0 0.0
        %1082 = vmatprep.subr.mxu0 0.0
        %1083 = vmatpush2.msra.mxu0 0.0
        %1084 = vmatprep.subr.mxu0 0.0
        %1085 = vmatpush2.msra.mxu0 0.0
        %1086 = vmatprep.subr.mxu0 0.0
        %1087 = vmatpush2.msra.mxu0 0.0
        %1088 = vmatprep.subr.mxu0 0.0
        %1089 = vmatpush2.msra.mxu0 0.0
        %1090 = vmatprep.subr.mxu0 0.0
        %1091 = vmatpush2.msra.mxu0 0.0
        %1092 = vmatprep.subr.mxu0 0.0
        %1093 = vmatpush2.msra.mxu0 0.0
        %1094 = vmatprep.subr.mxu0 0.0
        %1095 = vmatpush2.msra.mxu0 0.0
        %1096 = vmatprep.subr.mxu0 0.0
        %1097 = vmatpush2.msra.mxu0 0.0
        %1098 = vmatprep.subr.mxu0 0.0
        %1099 = vmatpush2.msra.mxu0 0.0
        %1100 = vmatprep.mubr.f32.mxu0 0.0
        %1101 = vmatmul.mubr.f32.gmra.mxu0 %v1034
        %v1102 = vpop.f32.mrf.mxu0
        %v1103 = vadd.f32 0.0, %v1102
        %v1104 = vpop.f32.mrf.mxu0
        %1105 = vdwg.mxu0
        %v1106 = vmul.f32 %v700, %v1030
        %v1107 = vpack.c.bf16 %v1106, %v1106
        %v1108 = vld [vmem:[#allocation6] sm:$0xf]
        %v1110 = vsel %vm791, %v1108, 0
        %v1113 = vsel %vm886, %v1107, 0
        %1115 = vmatprep.subr.bf16.mxu0 0
        %1116 = vmatpush1.bf16.msra.mxu0 0
        %1117 = vmatprep.subr.bf16.mxu0 0
        %1118 = vmatpush1.bf16.msra.mxu0 0
        %1119 = vmatprep.subr.bf16.mxu0 0
        %1120 = vmatpush1.bf16.msra.mxu0 0
        %1121 = vmatprep.subr.bf16.mxu0 0
        %1122 = vmatpush1.bf16.msra.mxu0 0
        %1123 = vmatprep.subr.bf16.mxu0 0
        %1124 = vmatpush1.bf16.msra.mxu0 0
        %1125 = vmatprep.subr.bf16.mxu0 0
        %1126 = vmatpush1.bf16.msra.mxu0 0
        %1127 = vmatprep.subr.bf16.mxu0 0
        %1128 = vmatpush1.bf16.msra.mxu0 0
        %1129 = vmatprep.subr.bf16.mxu0 0
        %1130 = vmatpush1.bf16.msra.mxu0 %v1113
        %1131 = vmatprep.subr.bf16.mxu0 0
        %1132 = vmatpush2.bf16.msra.mxu0 0
        %1133 = vmatprep.subr.bf16.mxu0 0
        %1134 = vmatpush2.bf16.msra.mxu0 0
        %1135 = vmatprep.subr.bf16.mxu0 0
        %1136 = vmatpush2.bf16.msra.mxu0 0
        %1137 = vmatprep.subr.bf16.mxu0 0
        %1138 = vmatpush2.bf16.msra.mxu0 0
        %1139 = vmatprep.subr.bf16.mxu0 0
        %1140 = vmatpush2.bf16.msra.mxu0 0
        %1141 = vmatprep.subr.bf16.mxu0 0
        %1142 = vmatpush2.bf16.msra.mxu0 0
        %1143 = vmatprep.subr.bf16.mxu0 0
        %1144 = vmatpush2.bf16.msra.mxu0 0
        %1145 = vmatprep.subr.bf16.mxu0 0
        %1146 = vmatpush2.bf16.msra.mxu0 0
        %1147 = vmatprep.mubr.bf16.mxu0 0
        %1148 = vmatmul.mubr.bf16.gmra.mxu0 %v1110
        %v1149 = vpop.f32.mrf.mxu0
        %v1150 = vadd.f32 0.0, %v1149
        %v1151 = vpop.f32.mrf.mxu0
        %v1152 = vpop.f32.mrf.mxu0
        %v1153 = vpop.f32.mrf.mxu0
        %1154 = vdwg.mxu0
        %v1155 = vld [vmem:[#allocation2] sm:$0x1]
        %v1156 = vmul.f32 %v957, %v1150
        %v1158 = vlaneseq
        %v1159 = vshrl.u32 %v1158, 7
        %v1160 = vsub.s32 0, %v1159
        %v1161 = vrot.slane %v1155, %v1160
        %v1163 = vmul.f32 %v1103, %v1161
        %v1164 = vadd.f32 %v1156, %v1163
        %vm1165 = vcmask 261127
        %1166 = vst.msk [vmem:[#allocation2 - $0x7] sm:$0x80] %vm1165, %v1164
        %p1167 = scmp.eq.s32.totalorder %s43, 1
        // Predicated region
        $region97: #{tpu_custom_call.1} parent=79 // pred_check
          %p1168 = pneg %p1167
        $region98: #{tpu_custom_call.1} parent=79 // pred_check_branch
          %1170 = sbr.rel (%p1168) target = $region100
        $region99: #{tpu_custom_call.1} parent=79 // pred_region
          %1171 = vst.msk [vmem:[%s605 - $0x7] sm:$0x80] %vm1165, %v1164
        $region100: #{tpu_custom_call.1} parent=79 // pred_fallthru
          _
        %v1172 = vld [vmem:[%s5] sm:$0xff]
        %v1173 = vld [vmem:[%s5 + $0x8] sm:$0xff]
        %v1174 = vld [vmem:[%s5 + $0x10] sm:$0xff]
        %v1175 = vld [vmem:[%s5 + $0x18] sm:$0xff]
        %v1177 = vsel %vm646, %v1164, 0
        %1179 = vmatprep.subr.mxu0 0.0
        %1180 = vmatpush1.msra.mxu0 0.0
        %1181 = vmatprep.subr.mxu0 0.0
        %1182 = vmatpush1.msra.mxu0 0.0
        %1183 = vmatprep.subr.mxu0 0.0
        %1184 = vmatpush1.msra.mxu0 0.0
        %1185 = vmatprep.subr.mxu0 0.0
        %1186 = vmatpush1.msra.mxu0 0.0
        %1187 = vmatprep.subr.mxu0 0.0
        %1188 = vmatpush1.msra.mxu0 0.0
        %1189 = vmatprep.subr.mxu0 0.0
        %1190 = vmatpush1.msra.mxu0 0.0
        %1191 = vmatprep.subr.mxu0 0.0
        %1192 = vmatpush1.msra.mxu0 0.0
        %1193 = vmatprep.subr.mxu0 0.0
        %1194 = vmatpush1.msra.mxu0 0.0
        %1195 = vmatprep.subr.mxu0 0.0
        %1196 = vmatpush1.msra.mxu0 0.0
        %1197 = vmatprep.subr.mxu0 0.0
        %1198 = vmatpush1.msra.mxu0 0.0
        %1199 = vmatprep.subr.mxu0 0.0
        %1200 = vmatpush1.msra.mxu0 0.0
        %1201 = vmatprep.subr.mxu0 0.0
        %1202 = vmatpush1.msra.mxu0 0.0
        %1203 = vmatprep.subr.mxu0 0.0
        %1204 = vmatpush1.msra.mxu0 %v1175
        %1205 = vmatprep.subr.mxu0 0.0
        %1206 = vmatpush1.msra.mxu0 %v1174
        %1207 = vmatprep.subr.mxu0 0.0
        %1208 = vmatpush1.msra.mxu0 %v1173
        %1209 = vmatprep.subr.mxu0 0.0
        %1210 = vmatpush1.msra.mxu0 %v1172
        %1211 = vmatprep.subr.mxu0 0.0
        %1212 = vmatpush2.msra.mxu0 0.0
        %1213 = vmatprep.subr.mxu0 0.0
        %1214 = vmatpush2.msra.mxu0 0.0
        %1215 = vmatprep.subr.mxu0 0.0
        %1216 = vmatpush2.msra.mxu0 0.0
        %1217 = vmatprep.subr.mxu0 0.0
        %1218 = vmatpush2.msra.mxu0 0.0
        %1219 = vmatprep.subr.mxu0 0.0
        %1220 = vmatpush2.msra.mxu0 0.0
        %1221 = vmatprep.subr.mxu0 0.0
        %1222 = vmatpush2.msra.mxu0 0.0
        %1223 = vmatprep.subr.mxu0 0.0
        %1224 = vmatpush2.msra.mxu0 0.0
        %1225 = vmatprep.subr.mxu0 0.0
        %1226 = vmatpush2.msra.mxu0 0.0
        %1227 = vmatprep.subr.mxu0 0.0
        %1228 = vmatpush2.msra.mxu0 0.0
        %1229 = vmatprep.subr.mxu0 0.0
        %1230 = vmatpush2.msra.mxu0 0.0
        %1231 = vmatprep.subr.mxu0 0.0
        %1232 = vmatpush2.msra.mxu0 0.0
        %1233 = vmatprep.subr.mxu0 0.0
        %1234 = vmatpush2.msra.mxu0 0.0
        %1235 = vmatprep.subr.mxu0 0.0
        %1236 = vmatpush2.msra.mxu0 0.0
        %1237 = vmatprep.subr.mxu0 0.0
        %1238 = vmatpush2.msra.mxu0 0.0
        %1239 = vmatprep.subr.mxu0 0.0
        %1240 = vmatpush2.msra.mxu0 0.0
        %1241 = vmatprep.subr.mxu0 0.0
        %1242 = vmatpush2.msra.mxu0 0.0
        %1243 = vmatprep.mubr.f32.mxu0 0.0
        %1244 = vmatmul.mubr.f32.gmra.mxu0 %v1177
        %v1245 = vpop.f32.mrf.mxu0
        %v1246 = vadd.f32 0.0, %v1245
        %v1247 = vpop.f32.mrf.mxu0
        %1248 = vdwg.mxu0
        %v1249 = vmul.f32 %v1246, 0.125
        %v1251 = vsel %vm882, %v1249, 0
        %1253 = vmatprep.subr.mxu0 0.0
        %1254 = vmatpush1.msra.mxu0 0.0
        %1255 = vmatprep.subr.mxu0 0.0
        %1256 = vmatpush1.msra.mxu0 0.0
        %1257 = vmatprep.subr.mxu0 0.0
        %1258 = vmatpush1.msra.mxu0 0.0
        %1259 = vmatprep.subr.mxu0 0.0
        %1260 = vmatpush1.msra.mxu0 0.0
        %1261 = vmatprep.subr.mxu0 0.0
        %1262 = vmatpush1.msra.mxu0 0.0
        %1263 = vmatprep.subr.mxu0 0.0
        %1264 = vmatpush1.msra.mxu0 0.0
        %1265 = vmatprep.subr.mxu0 0.0
        %1266 = vmatpush1.msra.mxu0 0.0
        %1267 = vmatprep.subr.mxu0 0.0
        %1268 = vmatpush1.msra.mxu0 0.0
        %1269 = vmatprep.subr.mxu0 0.0
        %1270 = vmatpush1.msra.mxu0 0.0
        %1271 = vmatprep.subr.mxu0 0.0
        %1272 = vmatpush1.msra.mxu0 0.0
        %1273 = vmatprep.subr.mxu0 0.0
        %1274 = vmatpush1.msra.mxu0 0.0
        %1275 = vmatprep.subr.mxu0 0.0
        %1276 = vmatpush1.msra.mxu0 0.0
        %1277 = vmatprep.subr.mxu0 0.0
        %1278 = vmatpush1.msra.mxu0 0.0
        %1279 = vmatprep.subr.mxu0 0.0
        %1280 = vmatpush1.msra.mxu0 0.0
        %1281 = vmatprep.subr.mxu0 0.0
        %1282 = vmatpush1.msra.mxu0 0.0
        %1283 = vmatprep.subr.mxu0 0.0
        %1284 = vmatpush1.msra.mxu0 %v888
        %1285 = vmatprep.subr.mxu0 0.0
        %1286 = vmatpush2.msra.mxu0 0.0
        %1287 = vmatprep.subr.mxu0 0.0
        %1288 = vmatpush2.msra.mxu0 0.0
        %1289 = vmatprep.subr.mxu0 0.0
        %1290 = vmatpush2.msra.mxu0 0.0
        %1291 = vmatprep.subr.mxu0 0.0
        %1292 = vmatpush2.msra.mxu0 0.0
        %1293 = vmatprep.subr.mxu0 0.0
        %1294 = vmatpush2.msra.mxu0 0.0
        %1295 = vmatprep.subr.mxu0 0.0
        %1296 = vmatpush2.msra.mxu0 0.0
        %1297 = vmatprep.subr.mxu0 0.0
        %1298 = vmatpush2.msra.mxu0 0.0
        %1299 = vmatprep.subr.mxu0 0.0
        %1300 = vmatpush2.msra.mxu0 0.0
        %1301 = vmatprep.subr.mxu0 0.0
        %1302 = vmatpush2.msra.mxu0 0.0
        %1303 = vmatprep.subr.mxu0 0.0
        %1304 = vmatpush2.msra.mxu0 0.0
        %1305 = vmatprep.subr.mxu0 0.0
        %1306 = vmatpush2.msra.mxu0 0.0
        %1307 = vmatprep.subr.mxu0 0.0
        %1308 = vmatpush2.msra.mxu0 0.0
        %1309 = vmatprep.subr.mxu0 0.0
        %1310 = vmatpush2.msra.mxu0 0.0
        %1311 = vmatprep.subr.mxu0 0.0
        %1312 = vmatpush2.msra.mxu0 0.0
        %1313 = vmatprep.subr.mxu0 0.0
        %1314 = vmatpush2.msra.mxu0 0.0
        %1315 = vmatprep.subr.mxu0 0.0
        %1316 = vmatpush2.msra.mxu0 0.0
        %1317 = vmatprep.mubr.f32.mxu0 0.0
        %1318 = vmatmul.mubr.f32.gmra.mxu0 %v1251
        %v1319 = vpop.f32.mrf.mxu0
        %v1320 = vadd.f32 0.0, %v1319
        %v1321 = vpop.f32.mrf.mxu0
        %1322 = vdwg.mxu0
        %v1323 = vsub.f32 %v1164, %v1320
        %v1324 = vmul.f32 %v1323, %v1323
        %v1326 = vsel %vm646, %v1324, 0
        %1328 = vmatprep.subr.mxu0 0.0
        %1329 = vmatpush1.msra.mxu0 0.0
        %1330 = vmatprep.subr.mxu0 0.0
        %1331 = vmatpush1.msra.mxu0 0.0
        %1332 = vmatprep.subr.mxu0 0.0
        %1333 = vmatpush1.msra.mxu0 0.0
        %1334 = vmatprep.subr.mxu0 0.0
        %1335 = vmatpush1.msra.mxu0 0.0
        %1336 = vmatprep.subr.mxu0 0.0
        %1337 = vmatpush1.msra.mxu0 0.0
        %1338 = vmatprep.subr.mxu0 0.0
        %1339 = vmatpush1.msra.mxu0 0.0
        %1340 = vmatprep.subr.mxu0 0.0
        %1341 = vmatpush1.msra.mxu0 0.0
        %1342 = vmatprep.subr.mxu0 0.0
        %1343 = vmatpush1.msra.mxu0 0.0
        %1344 = vmatprep.subr.mxu0 0.0
        %1345 = vmatpush1.msra.mxu0 0.0
        %1346 = vmatprep.subr.mxu0 0.0
        %1347 = vmatpush1.msra.mxu0 0.0
        %1348 = vmatprep.subr.mxu0 0.0
        %1349 = vmatpush1.msra.mxu0 0.0
        %1350 = vmatprep.subr.mxu0 0.0
        %1351 = vmatpush1.msra.mxu0 0.0
        %1352 = vmatprep.subr.mxu0 0.0
        %1353 = vmatpush1.msra.mxu0 %v1175
        %1354 = vmatprep.subr.mxu0 0.0
        %1355 = vmatpush1.msra.mxu0 %v1174
        %1356 = vmatprep.subr.mxu0 0.0
        %1357 = vmatpush1.msra.mxu0 %v1173
        %1358 = vmatprep.subr.mxu0 0.0
        %1359 = vmatpush1.msra.mxu0 %v1172
        %1360 = vmatprep.subr.mxu0 0.0
        %1361 = vmatpush2.msra.mxu0 0.0
        %1362 = vmatprep.subr.mxu0 0.0
        %1363 = vmatpush2.msra.mxu0 0.0
        %1364 = vmatprep.subr.mxu0 0.0
        %1365 = vmatpush2.msra.mxu0 0.0
        %1366 = vmatprep.subr.mxu0 0.0
        %1367 = vmatpush2.msra.mxu0 0.0
        %1368 = vmatprep.subr.mxu0 0.0
        %1369 = vmatpush2.msra.mxu0 0.0
        %1370 = vmatprep.subr.mxu0 0.0
        %1371 = vmatpush2.msra.mxu0 0.0
        %1372 = vmatprep.subr.mxu0 0.0
        %1373 = vmatpush2.msra.mxu0 0.0
        %1374 = vmatprep.subr.mxu0 0.0
        %1375 = vmatpush2.msra.mxu0 0.0
        %1376 = vmatprep.subr.mxu0 0.0
        %1377 = vmatpush2.msra.mxu0 0.0
        %1378 = vmatprep.subr.mxu0 0.0
        %1379 = vmatpush2.msra.mxu0 0.0
        %1380 = vmatprep.subr.mxu0 0.0
        %1381 = vmatpush2.msra.mxu0 0.0
        %1382 = vmatprep.subr.mxu0 0.0
        %1383 = vmatpush2.msra.mxu0 0.0
        %1384 = vmatprep.subr.mxu0 0.0
        %1385 = vmatpush2.msra.mxu0 0.0
        %1386 = vmatprep.subr.mxu0 0.0
        %1387 = vmatpush2.msra.mxu0 0.0
        %1388 = vmatprep.subr.mxu0 0.0
        %1389 = vmatpush2.msra.mxu0 0.0
        %1390 = vmatprep.subr.mxu0 0.0
        %1391 = vmatpush2.msra.mxu0 0.0
        %1392 = vmatprep.mubr.f32.mxu0 0.0
        %1393 = vmatmul.mubr.f32.gmra.mxu0 %v1326
        %v1394 = vpop.f32.mrf.mxu0
        %v1395 = vadd.f32 0.0, %v1394
        %v1396 = vpop.f32.mrf.mxu0
        %1397 = vdwg.mxu0
        %v1398 = vmul.f32 %v1395, 0.125
        %v1399 = vadd.f32 %v1398, 1e-05
        %v1400 = vrsqrt.pop %v1399
        %v1402 = vsel %vm882, %v1400, 0
        %1404 = vmatprep.subr.mxu0 0.0
        %1405 = vmatpush1.msra.mxu0 0.0
        %1406 = vmatprep.subr.mxu0 0.0
        %1407 = vmatpush1.msra.mxu0 0.0
        %1408 = vmatprep.subr.mxu0 0.0
        %1409 = vmatpush1.msra.mxu0 0.0
        %1410 = vmatprep.subr.mxu0 0.0
        %1411 = vmatpush1.msra.mxu0 0.0
        %1412 = vmatprep.subr.mxu0 0.0
        %1413 = vmatpush1.msra.mxu0 0.0
        %1414 = vmatprep.subr.mxu0 0.0
        %1415 = vmatpush1.msra.mxu0 0.0
        %1416 = vmatprep.subr.mxu0 0.0
        %1417 = vmatpush1.msra.mxu0 0.0
        %1418 = vmatprep.subr.mxu0 0.0
        %1419 = vmatpush1.msra.mxu0 0.0
        %1420 = vmatprep.subr.mxu0 0.0
        %1421 = vmatpush1.msra.mxu0 0.0
        %1422 = vmatprep.subr.mxu0 0.0
        %1423 = vmatpush1.msra.mxu0 0.0
        %1424 = vmatprep.subr.mxu0 0.0
        %1425 = vmatpush1.msra.mxu0 0.0
        %1426 = vmatprep.subr.mxu0 0.0
        %1427 = vmatpush1.msra.mxu0 0.0
        %1428 = vmatprep.subr.mxu0 0.0
        %1429 = vmatpush1.msra.mxu0 0.0
        %1430 = vmatprep.subr.mxu0 0.0
        %1431 = vmatpush1.msra.mxu0 0.0
        %1432 = vmatprep.subr.mxu0 0.0
        %1433 = vmatpush1.msra.mxu0 0.0
        %1434 = vmatprep.subr.mxu0 0.0
        %1435 = vmatpush1.msra.mxu0 %v888
        %1436 = vmatprep.subr.mxu0 0.0
        %1437 = vmatpush2.msra.mxu0 0.0
        %1438 = vmatprep.subr.mxu0 0.0
        %1439 = vmatpush2.msra.mxu0 0.0
        %1440 = vmatprep.subr.mxu0 0.0
        %1441 = vmatpush2.msra.mxu0 0.0
        %1442 = vmatprep.subr.mxu0 0.0
        %1443 = vmatpush2.msra.mxu0 0.0
        %1444 = vmatprep.subr.mxu0 0.0
        %1445 = vmatpush2.msra.mxu0 0.0
        %1446 = vmatprep.subr.mxu0 0.0
        %1447 = vmatpush2.msra.mxu0 0.0
        %1448 = vmatprep.subr.mxu0 0.0
        %1449 = vmatpush2.msra.mxu0 0.0
        %1450 = vmatprep.subr.mxu0 0.0
        %1451 = vmatpush2.msra.mxu0 0.0
        %1452 = vmatprep.subr.mxu0 0.0
        %1453 = vmatpush2.msra.mxu0 0.0
        %1454 = vmatprep.subr.mxu0 0.0
        %1455 = vmatpush2.msra.mxu0 0.0
        %1456 = vmatprep.subr.mxu0 0.0
        %1457 = vmatpush2.msra.mxu0 0.0
        %1458 = vmatprep.subr.mxu0 0.0
        %1459 = vmatpush2.msra.mxu0 0.0
        %1460 = vmatprep.subr.mxu0 0.0
        %1461 = vmatpush2.msra.mxu0 0.0
        %1462 = vmatprep.subr.mxu0 0.0
        %1463 = vmatpush2.msra.mxu0 0.0
        %1464 = vmatprep.subr.mxu0 0.0
        %1465 = vmatpush2.msra.mxu0 0.0
        %1466 = vmatprep.subr.mxu0 0.0
        %1467 = vmatpush2.msra.mxu0 0.0
        %1468 = vmatprep.mubr.f32.mxu0 0.0
        %1469 = vmatmul.mubr.f32.gmra.mxu0 %v1402
        %v1470 = vpop.f32.mrf.mxu0
        %v1471 = vadd.f32 0.0, %v1470
        %v1472 = vpop.f32.mrf.mxu0
        %1473 = vdwg.mxu0
        %v1474 = vmul.f32 %v1323, %v1471
        %v1475 = vld [vmem:[%s13] sm:$0x1]
        %v1477 = vlaneseq
        %v1478 = vshrl.u32 %v1477, 7
        %v1479 = vsub.s32 0, %v1478
        %v1480 = vrot.slane %v1475, %v1479
        %v1482 = vmul.f32 %v1474, %v1480
        %v1483 = vld [vmem:[%s14] sm:$0x1]
        %v1485 = vlaneseq
        %v1486 = vshrl.u32 %v1485, 7
        %v1487 = vsub.s32 0, %v1486
        %v1488 = vrot.slane %v1483, %v1487
        %v1490 = vadd.f32 %v1482, %v1488
        %v1491 = vpack.c.bf16 %v1490, %v1490
        %v1492 = vld [vmem:[%s8] sm:$0xf]
        %v1493 = vld [vmem:[%s8 + $0x4] sm:$0xf]
        %v1494 = vld [vmem:[%s8 + $0x8] sm:$0xf]
        %v1495 = vld [vmem:[%s8 + $0xc] sm:$0xf]
        %v1496 = vld [vmem:[%s9] sm:$0x1]
        %v1498 = vlaneseq
        %v1499 = vshrl.u32 %v1498, 7
        %v1500 = vsub.s32 0, %v1499
        %v1501 = vrot.slane %v1496, %v1500
        %v1507 = vunpack.c.l.b16 %v1492
        %v1508 = vunpack.c.l.b16 %v1493
        %v1509 = vunpack.c.l.b16 %v1494
        %v1510 = vunpack.c.l.b16 %v1495
        %v1511 = vpack.c.b16 %v1508, %v1507
        %v1512 = vpack.c.b16 %v1510, %v1509
        %v1516 = vsel %vm646, %v1491, 0
        %1518 = vmatprep.subr.bf16.mxu0 0
        %1519 = vmatpush1.bf16.msra.mxu0 0
        %1520 = vmatprep.subr.bf16.mxu0 0
        %1521 = vmatpush1.bf16.msra.mxu0 0
        %1522 = vmatprep.subr.bf16.mxu0 0
        %1523 = vmatpush1.bf16.msra.mxu0 0
        %1524 = vmatprep.subr.bf16.mxu0 0
        %1525 = vmatpush1.bf16.msra.mxu0 0
        %1526 = vmatprep.subr.bf16.mxu0 0
        %1527 = vmatpush1.bf16.msra.mxu0 0
        %1528 = vmatprep.subr.bf16.mxu0 0
        %1529 = vmatpush1.bf16.msra.mxu0 0
        %1530 = vmatprep.subr.bf16.mxu0 0
        %1531 = vmatpush1.bf16.msra.mxu0 %v1512
        %1532 = vmatprep.subr.bf16.mxu0 0
        %1533 = vmatpush1.bf16.msra.mxu0 %v1511
        %1534 = vmatprep.subr.bf16.mxu0 0
        %1535 = vmatpush2.bf16.msra.mxu0 0
        %1536 = vmatprep.subr.bf16.mxu0 0
        %1537 = vmatpush2.bf16.msra.mxu0 0
        %1538 = vmatprep.subr.bf16.mxu0 0
        %1539 = vmatpush2.bf16.msra.mxu0 0
        %1540 = vmatprep.subr.bf16.mxu0 0
        %1541 = vmatpush2.bf16.msra.mxu0 0
        %1542 = vmatprep.subr.bf16.mxu0 0
        %1543 = vmatpush2.bf16.msra.mxu0 0
        %1544 = vmatprep.subr.bf16.mxu0 0
        %1545 = vmatpush2.bf16.msra.mxu0 0
        %1546 = vmatprep.subr.bf16.mxu0 0
        %1547 = vmatpush2.bf16.msra.mxu0 0
        %1548 = vmatprep.subr.bf16.mxu0 0
        %1549 = vmatpush2.bf16.msra.mxu0 0
        %1550 = vmatprep.mubr.bf16.mxu0 0
        %1551 = vmatmul.mubr.bf16.gmra.mxu0 %v1516
        %v1552 = vpop.f32.mrf.mxu0
        %v1553 = vadd.f32 %v1501, %v1552
        %v1554 = vpop.f32.mrf.mxu0
        %v1555 = vpop.f32.mrf.mxu0
        %v1556 = vpop.f32.mrf.mxu0
        %1557 = vdwg.mxu0
        %1558 = vrot.lane.b32.xlu0 %v695, 64
        %v1559 = vpop.permute.xlu0 %1558
        %v1561 = vmul.f32 %v1553, %v1559
        %1562 = vst.msk [vmem:[%s599] sm:$0xff] %vm646, %v1561
        %s1563 = sand.u32 %s387, 1
        %s1564 = scalar_lea.sflag [#allocation5], %s1563
        %s1565 = sand.u32 %s387, 1
        %s1566 = smul.addr %s1565, 8
        %s1567 = scalar_lea.vmem [#allocation9], %s1566
        %s1568 = sand.u32 %s413, 1
        %s1569 = scalar_lea.sflag [#allocation11], %s1568
        %s1570 = sand.u32 %s413, 1
        %s1571 = scalar_lea.vmem [#allocation10], %s1570
        // Predicated region
        $region101: #{tpu_custom_call.1} parent=79 // pred_check
          %p1572 = pneg %p397
        $region102: #{tpu_custom_call.1} parent=79 // pred_check_branch
          %1574 = sbr.rel (%p1572) target = $region104
        $region103: #{tpu_custom_call.1} parent=79 // pred_region
          %s1576 = ssub.s32 128, 128
          %1577 = vsyncadd %s1564, %s1576
          %s1578 = smul.addr %s42, 2
          %s1579 = sadd.s32 %s43, %s1578
          %s1580 = smul.addr %s1579, 128
          %s1581 = scalar_lea.hbm %s15, %s1580
          %s1583 = sshll.u32 %s1567, 4
          %s1584 = int_to_ptr.vmem [resolvable:$true] %s1583
          %1586 = dma.vmem_to_hbm [thread:$0]  %s1584, 128, %s1581, %s1564
        $region104: #{tpu_custom_call.1} parent=79 // pred_fallthru
          _
        // Predicated region
        $region105: #{tpu_custom_call.1} parent=79 // pred_check
          %p1587 = pneg %p423
        $region106: #{tpu_custom_call.1} parent=79 // pred_check_branch
          %1589 = sbr.rel (%p1587) target = $region108
        $region107: #{tpu_custom_call.1} parent=79 // pred_region
          %s1591 = ssub.s32 16, 16
          %1592 = vsyncadd %s1569, %s1591
          %s1593 = smul.addr %s42, 16
          %s1594 = scalar_lea.hbm %s16, %s1593
          %s1596 = sshll.u32 %s1571, 4
          %s1597 = int_to_ptr.vmem [resolvable:$true] %s1596
          %1599 = dma.vmem_to_hbm [thread:$0]  %s1597, 16, %s1594, %s1569
        $region108: #{tpu_custom_call.1} parent=79 // pred_fallthru
          _
      $region80: #{tpu_custom_call.1} parent=5 // pred_fallthru
        _
      %p1600 = scmp.le.s32.totalorder 2, %s33
      // Predicated region
      $region109: #{tpu_custom_call.1} parent=5 // pred_check
        %p1601 = pneg %p1600
      $region110: #{tpu_custom_call.1} parent=5 // pred_check_branch
        %1603 = sbr.rel (%p1601) target = $region112
      $region111: #{tpu_custom_call.1} parent=5 // pred_region
        %s1604 = ssub.s32 %s33, 2
        // Predicated region
        $region113: #{tpu_custom_call.1} parent=111 // pred_check
          %p1605 = pneg %p403
        $region114: #{tpu_custom_call.1} parent=111 // pred_check_branch
          %1607 = sbr.rel (%p1605) target = $region116
        $region115: #{tpu_custom_call.1} parent=111 // pred_region
          %s1608 = sand.u32 %s388, 1
          %s1609 = scalar_lea.sflag [#allocation5], %s1608
          %s1610 = sand.u32 %s388, 1
          %s1611 = smul.addr %s1610, 8
          %s1612 = scalar_lea.vmem [#allocation9], %s1611
          %1613 = dma.done %s1609, 128
        $region116: #{tpu_custom_call.1} parent=111 // pred_fallthru
          _
        // Predicated region
        $region117: #{tpu_custom_call.1} parent=111 // pred_check
          %p1614 = pneg %p429
        $region118: #{tpu_custom_call.1} parent=111 // pred_check_branch
          %1616 = sbr.rel (%p1614) target = $region120
        $region119: #{tpu_custom_call.1} parent=111 // pred_region
          %s1617 = sand.u32 %s414, 1
          %s1618 = scalar_lea.sflag [#allocation11], %s1617
          %s1619 = sand.u32 %s414, 1
          %s1620 = scalar_lea.vmem [#allocation10], %s1619
          %1621 = dma.done %s1618, 16
        $region120: #{tpu_custom_call.1} parent=111 // pred_fallthru
          _
      $region112: #{tpu_custom_call.1} parent=5 // pred_fallthru
        _
    $region6: #{tpu_custom_call.1} parent=1 // loop_footer
      %s37 = sadd.s32 1, %s33
    $region7: #{tpu_custom_call.1} parent=1 // loop_footer_branch
      %32 = sbr.rel target = $region3
    $region8: #{tpu_custom_call.1} parent=1 // loop_exit
      _
    %1622 = vsyncpa [#allocation4], 1
    %s1623 = scalar_lea.sflag [#allocation4], 1
    %1624 = vsyncpa %s1623, 1
    %1625 = vsyncpa [#allocation7], 1
    %1626 = vsyncpa [#allocation5], 1
    %s1627 = scalar_lea.sflag [#allocation5], 1
    %1628 = vsyncpa %s1627, 1
    %1629 = vsyncpa [#allocation11], 1
    %s1630 = scalar_lea.sflag [#allocation11], 1
    %1631 = vsyncpa %s1630, 1

</llo_original>
